<compile_context>
chip_gen: v6e
topology: v6e:2x2x1
jax: 0.10.0
libtpu: 0.0.40
codegen_flags: <defaults>
</compile_context>

<pallas_src>
import functools

import jax
import jax.numpy as jnp
from jax.experimental import pallas as pl
from jax.experimental.pallas import tpu as pltpu


HIDDEN = 512   # hardcoded in the PyTorch module
LANE = 128     # TPU lane width


def _round_up(n, m):
    return ((n + m - 1) // m) * m


def _cdiv(a, b):
    return -(-a // b)


# ----------------------------------------------------------------------------
# Kernel
# ----------------------------------------------------------------------------
def _decoder_samp_kernel(z_ref, w1_ref, b1_ref, wh_ref, bh_ref, eps_ref,
                         samp_ref, mu_ref, lv_ref, *, x_dim, x_pad):
    # h1 = z @ W1 + b1     -- bf16 MXU operands, f32 accumulation      (TB, 512)
    h1 = jnp.dot(z_ref[...].astype(jnp.bfloat16), w1_ref[...],
                 preferred_element_type=jnp.float32) + b1_ref[...]
    # Fused head: one MXU pass producing [mu | logvar]                 (TB, 2*Xp)
    head = jnp.dot(h1.astype(jnp.bfloat16), wh_ref[...],
                   preferred_element_type=jnp.float32) + bh_ref[...]
    mu = head[:, 0:x_dim]                      # 128-aligned starts, width x_dim
    logvar = head[:, x_pad:x_pad + x_dim]
    # reparameterize: sample = mu + eps * exp(0.5 * logvar)
    samp_ref[...] = mu + eps_ref[...] * jnp.exp(0.5 * logvar)
    mu_ref[...] = mu
    lv_ref[...] = logvar


# ----------------------------------------------------------------------------
# VMEM budgeting (generation-aware)
# ----------------------------------------------------------------------------
def _physical_vmem_bytes():
    """Per-core VMEM capacity; conservative 64 MiB fallback (v7x)."""
    try:
        info = pltpu.get_tpu_info()
        cap = int(getattr(info, "vmem_capacity_bytes", 0) or 0)
        if cap > 0:
            return cap
    except Exception:
        pass
    return 64 << 20


def _vmem_need(tb, z_dim, x_dim, x_pad, weight_bufs):
    f32, bf16 = 4, 2
    zl = _round_up(z_dim, LANE)
    xl = _round_up(x_dim, LANE)
    # double-buffered streamed tiles: z + eps in, 3 outputs out
    streamed = (tb * zl + tb * xl + 3 * tb * xl) * f32
    # weights (bf16) + biases (f32), buffered `weight_bufs` deep
    weights = (z_dim * HIDDEN + HIDDEN * 2 * x_pad) * bf16 \
        + (8 * HIDDEN + 8 * 2 * x_pad) * f32
    # in-kernel intermediates: h1, head, sliced mu/logvar/sample temporaries
    interm = (tb * HIDDEN + tb * 2 * x_pad + 3 * tb * xl) * f32
    return 2 * streamed + weight_bufs * weights + interm


def _vmem_limit(need, phys_vmem):
    # ~44 MiB cap on 64 MiB parts (v7x), ~92 MiB on 128 MiB parts (v5e/v6e)
    cap = max((phys_vmem * 3) // 4 - (4 << 20), 16 << 20)
    return int(min(max((need * 5) // 4, 32 << 20), cap))


# ----------------------------------------------------------------------------
# Parameter packing (done once, outside the per-call hot path)
# ----------------------------------------------------------------------------
def pack_params(params, x_dim):
    """Fuse mu/std head weights into one padded bf16 [512, 2*Xp] matrix."""
    x_pad = _round_up(x_dim, LANE)
    wh = jnp.zeros((HIDDEN, 2 * x_pad), jnp.float32)
    wh = wh.at[:, :x_dim].set(params["wmu"])
    wh = wh.at[:, x_pad:x_pad + x_dim].set(params["wstd"])
    bh = jnp.zeros((1, 2 * x_pad), jnp.float32)
    bh = bh.at[:, :x_dim].set(params["bmu"].reshape(1, -1))
    bh = bh.at[:, x_pad:x_pad + x_dim].set(params["bstd"].reshape(1, -1))
    return {
        "w1": params["w1"].astype(jnp.bfloat16),
        "b1": params["b1"].reshape(1, -1).astype(jnp.float32),
        "w_head": wh.astype(jnp.bfloat16),
        "b_head": bh,
        "x_dim": x_dim,
        "x_pad": x_pad,
    }


# ----------------------------------------------------------------------------
# Forward wrapper
# ----------------------------------------------------------------------------
def decoder_samp_forward(z, packed, eps, *, max_tile_b=512):
    """Fused decoder + reparameterization.

    z:      [B, z_dim] float32
    packed: result of pack_params(...)
    eps:    [B, x_dim] float32 standard-normal noise
    returns (output, mu, logvar), each [B, x_dim] float32
    """
    B, z_dim = z.shape
    x_dim = packed["x_dim"]
    x_pad = packed["x_pad"]

    # --- batch tile: divisor-aware (no padding blow-up); >=2 grid steps when
    # B allows (keeps both v7x TensorCores busy); shrink to fit VMEM budget ---
    n_tiles = _cdiv(B, max_tile_b)
    if _round_up(B, 8) >= 16:
        n_tiles = max(n_tiles, 2)
    tb = _round_up(_cdiv(B, n_tiles), 8)

    phys_vmem = _physical_vmem_bytes()
    budget = (phys_vmem * 7) // 10
    while tb > 8 and _vmem_need(tb, z_dim, x_dim, x_pad, weight_bufs=1) > budget:
        tb = max(8, _round_up(tb // 2, 8))
    b_pad = _round_up(B, tb)

    z_p = z.astype(jnp.float32)
    eps_p = eps.astype(jnp.float32)
    if b_pad != B:
        pad = b_pad - B
        z_p = jnp.pad(z_p, ((0, pad), (0, 0)))
        eps_p = jnp.pad(eps_p, ((0, pad), (0, 0)))

    kernel = functools.partial(_decoder_samp_kernel, x_dim=x_dim, x_pad=x_pad)
    args = (z_p, packed["w1"], packed["b1"],
            packed["w_head"], packed["b_head"], eps_p)

    def build(single_buffer_weights):
        w_kw = {"pipeline_mode": pl.Buffered(1)} if single_buffer_weights else {}
        weight_bufs = 1 if single_buffer_weights else 2
        need = _vmem_need(tb, z_dim, x_dim, x_pad, weight_bufs=weight_bufs)
        in_specs = [
            pl.BlockSpec((tb, z_dim), lambda i: (i, 0)),                  # z (streamed)
            pl.BlockSpec((z_dim, HIDDEN), lambda i: (0, 0), **w_kw),      # W1 (resident)
            pl.BlockSpec((1, HIDDEN), lambda i: (0, 0), **w_kw),          # b1 (resident)
            pl.BlockSpec((HIDDEN, 2 * x_pad), lambda i: (0, 0), **w_kw),  # W_head
            pl.BlockSpec((1, 2 * x_pad), lambda i: (0, 0), **w_kw),       # b_head
            pl.BlockSpec((tb, x_dim), lambda i: (i, 0)),                  # eps (streamed)
        ]
        out_specs = tuple(pl.BlockSpec((tb, x_dim), lambda i: (i, 0))
                          for _ in range(3))
        return pl.pallas_call(
            kernel,
            out_shape=tuple(jax.ShapeDtypeStruct((b_pad, x_dim), jnp.float32)
                            for _ in range(3)),
            grid=(b_pad // tb,),
            in_specs=in_specs,
            out_specs=out_specs,
            compiler_params=pltpu.CompilerParams(
                dimension_semantics=("parallel",),
                vmem_limit_bytes=_vmem_limit(need, phys_vmem)),
        )

    try:
        samp, mu, logvar = build(True)(*args)
        jax.block_until_ready((samp, mu, logvar))
    except Exception:
        # pipeline_mode=pl.Buffered(1) unsupported on this jax build ->
        # fall back to default (double-buffered) weights.
        samp, mu, logvar = build(False)(*args)

    if b_pad != B:
        samp, mu, logvar = samp[:B], mu[:B], logvar[:B]
    return samp, mu, logvar


# ----------------------------------------------------------------------------
# Init (PyTorch-Linear-style uniform +/- 1/sqrt(fan_in)), weights as [in, out]
# ----------------------------------------------------------------------------
def init_params(key, z_dim, x_dim):
    ks = jax.random.split(key, 6)

    def linear(kw, kb, fan_in, fan_out):
        bound = 1.0 / jnp.sqrt(fan_in)
        w = jax.random.uniform(kw, (fan_in, fan_out), jnp.float32, -bound, bound)
        b = jax.random.uniform(kb, (1, fan_out), jnp.float32, -bound, bound)
        return w, b

    w1, b1 = linear(ks[0], ks[1], z_dim, HIDDEN)
    wmu, bmu = linear(ks[2], ks[3], HIDDEN, x_dim)
    wstd, bstd = linear(ks[4], ks[5], HIDDEN, x_dim)
    return {"w1": w1, "b1": b1, "wmu": wmu, "bmu": bmu,
            "wstd": wstd, "bstd": bstd}


if __name__ == "__main__":
    key = jax.random.PRNGKey(0)
    k_param, k_z, k_eps = jax.random.split(key, 3)

    B, z_dim, x_dim = 8, 32, 16
    params = init_params(k_param, z_dim, x_dim)
    packed = pack_params(params, x_dim)

    z = jax.random.normal(k_z, (B, z_dim), dtype=jnp.float32)
    # eps ~ N(0,1) generated host-side for determinism (same role as randn_like)
    eps = jax.random.normal(k_eps, (B, x_dim), dtype=jnp.float32)

    output, mu, logvar = decoder_samp_forward(z, packed, eps)
    jax.block_until_ready((output, mu, logvar))

    # Pure-JAX f32 reference (kernel matmuls run in bf16 -> relaxed tolerance)
    h1_ref = z @ params["w1"] + params["b1"]
    mu_ref = h1_ref @ params["wmu"] + params["bmu"]
    lv_ref = h1_ref @ params["wstd"] + params["bstd"]
    out_ref = mu_ref + eps * jnp.exp(0.5 * lv_ref)

    assert output.shape == (B, x_dim) and mu.shape == (B, x_dim) \
        and logvar.shape == (B, x_dim)
    assert jnp.allclose(mu, mu_ref, atol=2e-2, rtol=2e-2)
    assert jnp.allclose(logvar, lv_ref, atol=2e-2, rtol=2e-2)
    assert jnp.allclose(output, out_ref, atol=2e-2, rtol=2e-2)

    print("KERNEL_OK")
</pallas_src>

<mosaic_0001>
module attributes {stable_mosaic.version = 11 : i64} {
  func.func @_decoder_samp_kernel(%arg0: i32, %arg1: memref<8x32xf32, #tpu.memory_space<vmem>>, %arg2: memref<32x512xbf16, #tpu.memory_space<vmem>>, %arg3: memref<1x512xf32, #tpu.memory_space<vmem>>, %arg4: memref<512x256xbf16, #tpu.memory_space<vmem>>, %arg5: memref<1x256xf32, #tpu.memory_space<vmem>>, %arg6: memref<8x16xf32, #tpu.memory_space<vmem>>, %arg7: memref<8x16xf32, #tpu.memory_space<vmem>>, %arg8: memref<8x16xf32, #tpu.memory_space<vmem>>, %arg9: memref<8x16xf32, #tpu.memory_space<vmem>>) attributes {dimension_semantics = [#tpu.dimension_semantics<parallel>], iteration_bounds = array<i64: 1>, scalar_prefetch = 0 : i64, scratch_operands = 0 : i64, tpu.core_type = #tpu.core_type<tc>, window_params = [{transform_indices = @transform_0, window_bounds = array<i64: 8, 32>}, {pipeline_mode = #tpu.pipeline_mode<synchronous>, transform_indices = @transform_1, window_bounds = array<i64: 32, 512>}, {pipeline_mode = #tpu.pipeline_mode<synchronous>, transform_indices = @transform_2, window_bounds = array<i64: 1, 512>}, {pipeline_mode = #tpu.pipeline_mode<synchronous>, transform_indices = @transform_3, window_bounds = array<i64: 512, 256>}, {pipeline_mode = #tpu.pipeline_mode<synchronous>, transform_indices = @transform_4, window_bounds = array<i64: 1, 256>}, {transform_indices = @transform_5, window_bounds = array<i64: 8, 16>}, {transform_indices = @transform_6, window_bounds = array<i64: 8, 16>}, {transform_indices = @transform_7, window_bounds = array<i64: 8, 16>}, {transform_indices = @transform_8, window_bounds = array<i64: 8, 16>}]} {
    %c0 = arith.constant 0 : index
    %c0_0 = arith.constant 0 : index
    %0 = vector.load %arg1[%c0, %c0_0] : memref<8x32xf32, #tpu.memory_space<vmem>>, vector<8x32xf32>
    %1 = arith.truncf %0 : vector<8x32xf32> to vector<8x32xbf16>
    %c0_1 = arith.constant 0 : index
    %c0_2 = arith.constant 0 : index
    %2 = vector.load %arg2[%c0_1, %c0_2] : memref<32x512xbf16, #tpu.memory_space<vmem>>, vector<32x512xbf16>
    %cst = arith.constant dense<0.000000e+00> : vector<8x512xf32>
    %3 = tpu.matmul %1, %2, %cst {dimension_numbers = #tpu.dot_dimension_numbers<[1], [0], [0], [1], [0, 0, 1, 1], [], []>} : vector<8x32xbf16>, vector<32x512xbf16>, vector<8x512xf32> -> vector<8x512xf32>
    %c0_3 = arith.constant 0 : index
    %c0_4 = arith.constant 0 : index
    %4 = vector.load %arg3[%c0_3, %c0_4] : memref<1x512xf32, #tpu.memory_space<vmem>>, vector<1x512xf32>
    %5 = vector.broadcast %4 : vector<1x512xf32> to vector<8x512xf32>
    %6 = arith.addf %3, %5 : vector<8x512xf32>
    %7 = arith.truncf %6 : vector<8x512xf32> to vector<8x512xbf16>
    %c0_5 = arith.constant 0 : index
    %c0_6 = arith.constant 0 : index
    %8 = vector.load %arg4[%c0_5, %c0_6] : memref<512x256xbf16, #tpu.memory_space<vmem>>, vector<512x256xbf16>
    %cst_7 = arith.constant dense<0.000000e+00> : vector<8x256xf32>
    %9 = tpu.matmul %7, %8, %cst_7 {dimension_numbers = #tpu.dot_dimension_numbers<[1], [0], [0], [1], [0, 0, 1, 1], [], []>} : vector<8x512xbf16>, vector<512x256xbf16>, vector<8x256xf32> -> vector<8x256xf32>
    %c0_8 = arith.constant 0 : index
    %c0_9 = arith.constant 0 : index
    %10 = vector.load %arg5[%c0_8, %c0_9] : memref<1x256xf32, #tpu.memory_space<vmem>>, vector<1x256xf32>
    %11 = vector.broadcast %10 : vector<1x256xf32> to vector<8x256xf32>
    %12 = arith.addf %9, %11 : vector<8x256xf32>
    %13 = vector.extract_strided_slice %12 {offsets = [0, 0], sizes = [8, 16], strides = [1, 1]} : vector<8x256xf32> to vector<8x16xf32>
    %14 = vector.extract_strided_slice %12 {offsets = [0, 128], sizes = [8, 16], strides = [1, 1]} : vector<8x256xf32> to vector<8x16xf32>
    %c0_10 = arith.constant 0 : index
    %c0_11 = arith.constant 0 : index
    %15 = vector.load %arg6[%c0_10, %c0_11] : memref<8x16xf32, #tpu.memory_space<vmem>>, vector<8x16xf32>
    %cst_12 = arith.constant 5.000000e-01 : f32
    %16 = vector.broadcast %cst_12 : f32 to vector<8x16xf32>
    %17 = arith.mulf %16, %14 : vector<8x16xf32>
    %18 = math.exp %17 : vector<8x16xf32>
    %19 = arith.mulf %15, %18 : vector<8x16xf32>
    %20 = arith.addf %13, %19 : vector<8x16xf32>
    %c0_13 = arith.constant 0 : index
    %c0_14 = arith.constant 0 : index
    %21 = vector.load %arg7[%c0_13, %c0_14] : memref<8x16xf32, #tpu.memory_space<vmem>>, vector<8x16xf32>
    tpu.vector_store %arg7[%c0_13, %c0_14], %20 {strides = array<i32>} : memref<8x16xf32, #tpu.memory_space<vmem>>, vector<8x16xf32>,
    %c0_15 = arith.constant 0 : index
    %c0_16 = arith.constant 0 : index
    %22 = vector.load %arg8[%c0_15, %c0_16] : memref<8x16xf32, #tpu.memory_space<vmem>>, vector<8x16xf32>
    tpu.vector_store %arg8[%c0_15, %c0_16], %13 {strides = array<i32>} : memref<8x16xf32, #tpu.memory_space<vmem>>, vector<8x16xf32>,
    %c0_17 = arith.constant 0 : index
    %c0_18 = arith.constant 0 : index
    %23 = vector.load %arg9[%c0_17, %c0_18] : memref<8x16xf32, #tpu.memory_space<vmem>>, vector<8x16xf32>
    tpu.vector_store %arg9[%c0_17, %c0_18], %14 {strides = array<i32>} : memref<8x16xf32, #tpu.memory_space<vmem>>, vector<8x16xf32>,
    return
  }
  func.func @transform_0(%arg0: i32) -> (i32, i32) {
    %c0_i32 = arith.constant 0 : i32
    %c0_i32_0 = arith.constant 0 : i32
    return %arg0, %c0_i32 : i32, i32
  }
  func.func @transform_1(%arg0: i32) -> (i32, i32) {
    %c0_i32 = arith.constant 0 : i32
    %c0_i32_0 = arith.constant 0 : i32
    %c0_i32_1 = arith.constant 0 : i32
    return %c0_i32, %c0_i32_0 : i32, i32
  }
  func.func @transform_2(%arg0: i32) -> (i32, i32) {
    %c0_i32 = arith.constant 0 : i32
    %c0_i32_0 = arith.constant 0 : i32
    %c0_i32_1 = arith.constant 0 : i32
    return %c0_i32, %c0_i32_0 : i32, i32
  }
  func.func @transform_3(%arg0: i32) -> (i32, i32) {
    %c0_i32 = arith.constant 0 : i32
    %c0_i32_0 = arith.constant 0 : i32
    %c0_i32_1 = arith.constant 0 : i32
    return %c0_i32, %c0_i32_0 : i32, i32
  }
  func.func @transform_4(%arg0: i32) -> (i32, i32) {
    %c0_i32 = arith.constant 0 : i32
    %c0_i32_0 = arith.constant 0 : i32
    %c0_i32_1 = arith.constant 0 : i32
    return %c0_i32, %c0_i32_0 : i32, i32
  }
  func.func @transform_5(%arg0: i32) -> (i32, i32) {
    %c0_i32 = arith.constant 0 : i32
    %c0_i32_0 = arith.constant 0 : i32
    return %arg0, %c0_i32 : i32, i32
  }
  func.func @transform_6(%arg0: i32) -> (i32, i32) {
    %c0_i32 = arith.constant 0 : i32
    %c0_i32_0 = arith.constant 0 : i32
    return %arg0, %c0_i32 : i32, i32
  }
  func.func @transform_7(%arg0: i32) -> (i32, i32) {
    %c0_i32 = arith.constant 0 : i32
    %c0_i32_0 = arith.constant 0 : i32
    return %arg0, %c0_i32 : i32, i32
  }
  func.func @transform_8(%arg0: i32) -> (i32, i32) {
    %c0_i32 = arith.constant 0 : i32
    %c0_i32_0 = arith.constant 0 : i32
    return %arg0, %c0_i32 : i32, i32
  }
}

module attributes {stable_mosaic.version = 11 : i64} {
  func.func @_decoder_samp_kernel(%arg0: i32, %arg1: memref<8x32xf32, #tpu.memory_space<vmem>>, %arg2: memref<32x512xbf16, #tpu.memory_space<vmem>>, %arg3: memref<1x512xf32, #tpu.memory_space<vmem>>, %arg4: memref<512x256xbf16, #tpu.memory_space<vmem>>, %arg5: memref<1x256xf32, #tpu.memory_space<vmem>>, %arg6: memref<8x16xf32, #tpu.memory_space<vmem>>, %arg7: memref<8x16xf32, #tpu.memory_space<vmem>>, %arg8: memref<8x16xf32, #tpu.memory_space<vmem>>, %arg9: memref<8x16xf32, #tpu.memory_space<vmem>>) attributes {dimension_semantics = [#tpu.dimension_semantics<parallel>], iteration_bounds = array<i64: 1>, scalar_prefetch = 0 : i64, scratch_operands = 0 : i64, tpu.core_type = #tpu.core_type<tc>, window_params = [{transform_indices = @transform_0, window_bounds = array<i64: 8, 32>}, {pipeline_mode = #tpu.pipeline_mode<synchronous>, transform_indices = @transform_1, window_bounds = array<i64: 32, 512>}, {pipeline_mode = #tpu.pipeline_mode<synchronous>, transform_indices = @transform_2, window_bounds = array<i64: 1, 512>}, {pipeline_mode = #tpu.pipeline_mode<synchronous>, transform_indices = @transform_3, window_bounds = array<i64: 512, 256>}, {pipeline_mode = #tpu.pipeline_mode<synchronous>, transform_indices = @transform_4, window_bounds = array<i64: 1, 256>}, {transform_indices = @transform_5, window_bounds = array<i64: 8, 16>}, {transform_indices = @transform_6, window_bounds = array<i64: 8, 16>}, {transform_indices = @transform_7, window_bounds = array<i64: 8, 16>}, {transform_indices = @transform_8, window_bounds = array<i64: 8, 16>}]} {
    %c0 = arith.constant 0 : index
    %c0_0 = arith.constant 0 : index
    %0 = vector.load %arg1[%c0, %c0_0] : memref<8x32xf32, #tpu.memory_space<vmem>>, vector<8x32xf32>
    %1 = arith.truncf %0 : vector<8x32xf32> to vector<8x32xbf16>
    %c0_1 = arith.constant 0 : index
    %c0_2 = arith.constant 0 : index
    %2 = vector.load %arg2[%c0_1, %c0_2] : memref<32x512xbf16, #tpu.memory_space<vmem>>, vector<32x512xbf16>
    %cst = arith.constant dense<0.000000e+00> : vector<8x512xf32>
    %3 = tpu.matmul %1, %2, %cst {dimension_numbers = #tpu.dot_dimension_numbers<[1], [0], [0], [1], [0, 0, 1, 1], [], []>} : vector<8x32xbf16>, vector<32x512xbf16>, vector<8x512xf32> -> vector<8x512xf32>
    %c0_3 = arith.constant 0 : index
    %c0_4 = arith.constant 0 : index
    %4 = vector.load %arg3[%c0_3, %c0_4] : memref<1x512xf32, #tpu.memory_space<vmem>>, vector<1x512xf32>
    %5 = vector.broadcast %4 : vector<1x512xf32> to vector<8x512xf32>
    %6 = arith.addf %3, %5 : vector<8x512xf32>
    %7 = arith.truncf %6 : vector<8x512xf32> to vector<8x512xbf16>
    %c0_5 = arith.constant 0 : index
    %c0_6 = arith.constant 0 : index
    %8 = vector.load %arg4[%c0_5, %c0_6] : memref<512x256xbf16, #tpu.memory_space<vmem>>, vector<512x256xbf16>
    %cst_7 = arith.constant dense<0.000000e+00> : vector<8x256xf32>
    %9 = tpu.matmul %7, %8, %cst_7 {dimension_numbers = #tpu.dot_dimension_numbers<[1], [0], [0], [1], [0, 0, 1, 1], [], []>} : vector<8x512xbf16>, vector<512x256xbf16>, vector<8x256xf32> -> vector<8x256xf32>
    %c0_8 = arith.constant 0 : index
    %c0_9 = arith.constant 0 : index
    %10 = vector.load %arg5[%c0_8, %c0_9] : memref<1x256xf32, #tpu.memory_space<vmem>>, vector<1x256xf32>
    %11 = vector.broadcast %10 : vector<1x256xf32> to vector<8x256xf32>
    %12 = arith.addf %9, %11 : vector<8x256xf32>
    %13 = vector.extract_strided_slice %12 {offsets = [0, 0], sizes = [8, 16], strides = [1, 1]} : vector<8x256xf32> to vector<8x16xf32>
    %14 = vector.extract_strided_slice %12 {offsets = [0, 128], sizes = [8, 16], strides = [1, 1]} : vector<8x256xf32> to vector<8x16xf32>
    %c0_10 = arith.constant 0 : index
    %c0_11 = arith.constant 0 : index
    %15 = vector.load %arg6[%c0_10, %c0_11] : memref<8x16xf32, #tpu.memory_space<vmem>>, vector<8x16xf32>
    %cst_12 = arith.constant 5.000000e-01 : f32
    %16 = vector.broadcast %cst_12 : f32 to vector<8x16xf32>
    %17 = arith.mulf %16, %14 : vector<8x16xf32>
    %18 = math.exp %17 : vector<8x16xf32>
    %19 = arith.mulf %15, %18 : vector<8x16xf32>
    %20 = arith.addf %13, %19 : vector<8x16xf32>
    %c0_13 = arith.constant 0 : index
    %c0_14 = arith.constant 0 : index
    %21 = vector.load %arg7[%c0_13, %c0_14] : memref<8x16xf32, #tpu.memory_space<vmem>>, vector<8x16xf32>
    tpu.vector_store %arg7[%c0_13, %c0_14], %20 {strides = array<i32>} : memref<8x16xf32, #tpu.memory_space<vmem>>, vector<8x16xf32>,
    %c0_15 = arith.constant 0 : index
    %c0_16 = arith.constant 0 : index
    %22 = vector.load %arg8[%c0_15, %c0_16] : memref<8x16xf32, #tpu.memory_space<vmem>>, vector<8x16xf32>
    tpu.vector_store %arg8[%c0_15, %c0_16], %13 {strides = array<i32>} : memref<8x16xf32, #tpu.memory_space<vmem>>, vector<8x16xf32>,
    %c0_17 = arith.constant 0 : index
    %c0_18 = arith.constant 0 : index
    %23 = vector.load %arg9[%c0_17, %c0_18] : memref<8x16xf32, #tpu.memory_space<vmem>>, vector<8x16xf32>
    tpu.vector_store %arg9[%c0_17, %c0_18], %14 {strides = array<i32>} : memref<8x16xf32, #tpu.memory_space<vmem>>, vector<8x16xf32>,
    return
  }
  func.func @transform_0(%arg0: i32) -> (i32, i32) {
    %c0_i32 = arith.constant 0 : i32
    %c0_i32_0 = arith.constant 0 : i32
    return %arg0, %c0_i32 : i32, i32
  }
  func.func @transform_1(%arg0: i32) -> (i32, i32) {
    %c0_i32 = arith.constant 0 : i32
    %c0_i32_0 = arith.constant 0 : i32
    %c0_i32_1 = arith.constant 0 : i32
    return %c0_i32, %c0_i32_0 : i32, i32
  }
  func.func @transform_2(%arg0: i32) -> (i32, i32) {
    %c0_i32 = arith.constant 0 : i32
    %c0_i32_0 = arith.constant 0 : i32
    %c0_i32_1 = arith.constant 0 : i32
    return %c0_i32, %c0_i32_0 : i32, i32
  }
  func.func @transform_3(%arg0: i32) -> (i32, i32) {
    %c0_i32 = arith.constant 0 : i32
    %c0_i32_0 = arith.constant 0 : i32
    %c0_i32_1 = arith.constant 0 : i32
    return %c0_i32, %c0_i32_0 : i32, i32
  }
  func.func @transform_4(%arg0: i32) -> (i32, i32) {
    %c0_i32 = arith.constant 0 : i32
    %c0_i32_0 = arith.constant 0 : i32
    %c0_i32_1 = arith.constant 0 : i32
    return %c0_i32, %c0_i32_0 : i32, i32
  }
  func.func @transform_5(%arg0: i32) -> (i32, i32) {
    %c0_i32 = arith.constant 0 : i32
    %c0_i32_0 = arith.constant 0 : i32
    return %arg0, %c0_i32 : i32, i32
  }
  func.func @transform_6(%arg0: i32) -> (i32, i32) {
    %c0_i32 = arith.constant 0 : i32
    %c0_i32_0 = arith.constant 0 : i32
    return %arg0, %c0_i32 : i32, i32
  }
  func.func @transform_7(%arg0: i32) -> (i32, i32) {
    %c0_i32 = arith.constant 0 : i32
    %c0_i32_0 = arith.constant 0 : i32
    return %arg0, %c0_i32 : i32, i32
  }
  func.func @transform_8(%arg0: i32) -> (i32, i32) {
    %c0_i32 = arith.constant 0 : i32
    %c0_i32_0 = arith.constant 0 : i32
    return %arg0, %c0_i32 : i32, i32
  }
}

</mosaic_0001>

<llo_original>
// kernel: tpu_custom_call.1
$region0: #{tpu_custom_call.1}
  #allocation0 [shape = 'u32[]', space=smem, size = 0x4, offset = 0x4, fixed_abs, tag = 'smem constant byte address 0x4 - core index']
  #allocation1 [shape = 'u32[144,128]{1,0:T(1,128)}', space=vmem, size = 0x12000, scoped, tag = 'internal scratch']
  %s0 = inlined_call_operand.hbm [shape: f32[8,32], index: 0, kind: input, shape index: {}]
  %s1 = inlined_call_operand.hbm [shape: bf16[32,512], index: 1, kind: input, shape index: {}]
  %s2 = inlined_call_operand.hbm [shape: f32[1,512], index: 2, kind: input, shape index: {}]
  %s3 = inlined_call_operand.hbm [shape: bf16[512,256], index: 3, kind: input, shape index: {}]
  %s4 = inlined_call_operand.hbm [shape: f32[1,256], index: 4, kind: input, shape index: {}]
  %s5 = inlined_call_operand.vmem [shape: f32[8,16], index: 5, kind: input, shape index: {}]
  %s6 = inlined_call_operand.hbm [shape: f32[8,16], index: 6, kind: output, shape index: {0}]
  %s7 = inlined_call_operand.hbm [shape: f32[8,16], index: 7, kind: output, shape index: {1}]
  %s8 = inlined_call_operand.hbm [shape: f32[8,16], index: 8, kind: output, shape index: {2}]
  %9 = xla_tuple %s6, %s7, %s8
  %s10 = sld [smem:[#allocation0]]
  $region70: #{tpu_custom_call.1} parent=0
    _
  %s12 = ssub.s32 1, %s10
  %s13 = scalar_select 0, %s12, %s10
  $region1: #{tpu_custom_call.1} parent=0
    #allocation2 [shape = 'u8[4096]{0}', space=vmem, size = 0x1000, scoped, tag = 'input window, operand 0, single buffered']
    #allocation3 [shape = 's32[1]{0}', space=sflag, size = 0x4, scoped, tag = 'scoped memory for tpu_custom_call.1']
    #allocation4 [shape = 's32[1]{0}', space=sflag, size = 0x4, scoped, tag = 'scoped memory for tpu_custom_call.1']
    #allocation5 [shape = 'u8[32768]{0}', space=vmem, size = 0x8000, scoped, tag = 'input window, operand 1, single buffered']
    #allocation6 [shape = 's32[1]{0}', space=sflag, size = 0x4, scoped, tag = 'scoped memory for tpu_custom_call.1']
    #allocation7 [shape = 'u8[2048]{0}', space=vmem, size = 0x800, scoped, tag = 'input window, operand 2, single buffered']
    #allocation8 [shape = 'u8[262144]{0}', space=vmem, size = 0x40000, scoped, tag = 'input window, operand 3, single buffered']
    #allocation9 [shape = 's32[1]{0}', space=sflag, size = 0x4, scoped, tag = 'scoped memory for tpu_custom_call.1']
    #allocation10 [shape = 'u8[1024]{0}', space=vmem, size = 0x400, scoped, tag = 'input window, operand 4, single buffered']
    #allocation11 [shape = 'u8[4096]{0}', space=vmem, size = 0x1000, scoped, tag = 'output window, operand 0, single buffered']
    #allocation12 [shape = 'u8[4096]{0}', space=vmem, size = 0x1000, scoped, tag = 'output window, operand 1, single buffered']
    #allocation13 [shape = 's32[1]{0}', space=sflag, size = 0x4, scoped, tag = 'scoped memory for tpu_custom_call.1']
    #allocation14 [shape = 'u8[4096]{0}', space=vmem, size = 0x1000, scoped, tag = 'output window, operand 2, single buffered']
    %14 = vsyncpa [#allocation3], 0
    %15 = vsyncpa [#allocation6], 0
    %16 = vsyncpa [#allocation9], 0
    %17 = vsyncpa [#allocation4], 0
    %18 = vsyncpa [#allocation13], 0
    // Predicated region
    $region2: #{tpu_custom_call.1} parent=1 // pred_check
      _
    $region3: #{tpu_custom_call.1} parent=1 // pred_check_branch
      %20 = sbr.rel (0) target = $region5
    $region4: #{tpu_custom_call.1} parent=1 // pred_region
      %s22 = ssub.s32 128, 128
      %23 = vsyncadd [#allocation3], %s22
      %s25 = sshll.u32 [#allocation2], 4
      %s26 = int_to_ptr.vmem [resolvable:$true] %s25
      %28 = dma.hbm_to_vmem [thread:$0]  %s0, 128, %s26, [#allocation3]
    $region5: #{tpu_custom_call.1} parent=1 // pred_fallthru
      _
    // Predicated region
    $region6: #{tpu_custom_call.1} parent=1 // pred_check
      _
    $region7: #{tpu_custom_call.1} parent=1 // pred_check_branch
      %30 = sbr.rel (0) target = $region9
    $region8: #{tpu_custom_call.1} parent=1 // pred_region
      %s32 = ssub.s32 1024, 1024
      %33 = vsyncadd [#allocation6], %s32
      %s34 = sshll.u32 [#allocation5], 4
      %s35 = int_to_ptr.vmem [resolvable:$true] %s34
      %40 = dma.hbm_to_vmem [thread:$0]  %s1, 1024, %s35, [#allocation6], 256, 256, 16
    $region9: #{tpu_custom_call.1} parent=1 // pred_fallthru
      _
    // Predicated region
    $region10: #{tpu_custom_call.1} parent=1 // pred_check
      _
    $region11: #{tpu_custom_call.1} parent=1 // pred_check_branch
      %42 = sbr.rel (0) target = $region13
    $region12: #{tpu_custom_call.1} parent=1 // pred_region
      %s44 = ssub.s32 64, 64
      %45 = vsyncadd [#allocation6], %s44
      %s47 = sshll.u32 [#allocation7], 4
      %s48 = int_to_ptr.vmem [resolvable:$true] %s47
      %50 = dma.hbm_to_vmem [thread:$0]  %s2, 64, %s48, [#allocation6]
    $region13: #{tpu_custom_call.1} parent=1 // pred_fallthru
      _
    // Predicated region
    $region14: #{tpu_custom_call.1} parent=1 // pred_check
      _
    $region15: #{tpu_custom_call.1} parent=1 // pred_check_branch
      %52 = sbr.rel (0) target = $region17
    $region16: #{tpu_custom_call.1} parent=1 // pred_region
      %s54 = ssub.s32 8192, 8192
      %55 = vsyncadd [#allocation9], %s54
      %s56 = sshll.u32 [#allocation8], 4
      %s57 = int_to_ptr.vmem [resolvable:$true] %s56
      %62 = dma.hbm_to_vmem [thread:$0]  %s3, 8192, %s57, [#allocation9], 128, 128, 8
    $region17: #{tpu_custom_call.1} parent=1 // pred_fallthru
      _
    // Predicated region
    $region18: #{tpu_custom_call.1} parent=1 // pred_check
      _
    $region19: #{tpu_custom_call.1} parent=1 // pred_check_branch
      %64 = sbr.rel (0) target = $region21
    $region20: #{tpu_custom_call.1} parent=1 // pred_region
      %s66 = ssub.s32 32, 32
      %67 = vsyncadd [#allocation9], %s66
      %s69 = sshll.u32 [#allocation10], 4
      %s70 = int_to_ptr.vmem [resolvable:$true] %s69
      %72 = dma.hbm_to_vmem [thread:$0]  %s4, 32, %s70, [#allocation9]
    $region21: #{tpu_custom_call.1} parent=1 // pred_fallthru
      _
    // Predicated region
    $region22: #{tpu_custom_call.1} parent=1 // pred_check
      _
    $region23: #{tpu_custom_call.1} parent=1 // pred_check_branch
      %74 = sbr.rel (0) target = $region25
    $region24: #{tpu_custom_call.1} parent=1 // pred_region
      _
    $region25: #{tpu_custom_call.1} parent=1 // pred_fallthru
      _
    // Predicated region
    $region26: #{tpu_custom_call.1} parent=1 // pred_check
      _
    $region27: #{tpu_custom_call.1} parent=1 // pred_check_branch
      %76 = sbr.rel (0) target = $region29
    $region28: #{tpu_custom_call.1} parent=1 // pred_region
      %77 = dma.done [#allocation3], 128
    $region29: #{tpu_custom_call.1} parent=1 // pred_fallthru
      _
    // Predicated region
    $region30: #{tpu_custom_call.1} parent=1 // pred_check
      _
    $region31: #{tpu_custom_call.1} parent=1 // pred_check_branch
      %79 = sbr.rel (0) target = $region33
    $region32: #{tpu_custom_call.1} parent=1 // pred_region
      %80 = dma.done [#allocation6], 1024
    $region33: #{tpu_custom_call.1} parent=1 // pred_fallthru
      _
    // Predicated region
    $region34: #{tpu_custom_call.1} parent=1 // pred_check
      _
    $region35: #{tpu_custom_call.1} parent=1 // pred_check_branch
      %82 = sbr.rel (0) target = $region37
    $region36: #{tpu_custom_call.1} parent=1 // pred_region
      %83 = dma.done [#allocation6], 64
    $region37: #{tpu_custom_call.1} parent=1 // pred_fallthru
      _
    // Predicated region
    $region38: #{tpu_custom_call.1} parent=1 // pred_check
      _
    $region39: #{tpu_custom_call.1} parent=1 // pred_check_branch
      %85 = sbr.rel (0) target = $region41
    $region40: #{tpu_custom_call.1} parent=1 // pred_region
      %86 = dma.done [#allocation9], 8192
    $region41: #{tpu_custom_call.1} parent=1 // pred_fallthru
      _
    // Predicated region
    $region42: #{tpu_custom_call.1} parent=1 // pred_check
      _
    $region43: #{tpu_custom_call.1} parent=1 // pred_check_branch
      %88 = sbr.rel (0) target = $region45
    $region44: #{tpu_custom_call.1} parent=1 // pred_region
      %89 = dma.done [#allocation9], 32
    $region45: #{tpu_custom_call.1} parent=1 // pred_fallthru
      _
    %v91 = vld [vmem:[#allocation2] sm:$0xff]
    %v92 = vpack.c.bf16 %v91, %v91
    %v93 = vld [vmem:[#allocation5] sm:$0xff]
    %v94 = vld [vmem:[#allocation5 + $0x8] sm:$0xff]
    %v95 = vld [vmem:[#allocation5 + $0x10] sm:$0xff]
    %v96 = vld [vmem:[#allocation5 + $0x18] sm:$0xff]
    %v97 = vld [vmem:[#allocation5 + $0x20] sm:$0xff]
    %v98 = vld [vmem:[#allocation5 + $0x28] sm:$0xff]
    %v99 = vld [vmem:[#allocation5 + $0x30] sm:$0xff]
    %v100 = vld [vmem:[#allocation5 + $0x38] sm:$0xff]
    %v101 = vld [vmem:[#allocation7] sm:$0xf]
    %v103 = vlaneseq
    %v104 = vshrl.u32 %v103, 7
    %v105 = vsub.s32 0, %v104
    %v106 = vrot.slane %v101, %v105
    %v107 = vlaneseq
    %v108 = vshrl.u32 %v107, 7
    %v109 = vsub.s32 1, %v108
    %v110 = vrot.slane %v101, %v109
    %v111 = vlaneseq
    %v112 = vshrl.u32 %v111, 7
    %v113 = vsub.s32 2, %v112
    %v114 = vrot.slane %v101, %v113
    %v115 = vlaneseq
    %v116 = vshrl.u32 %v115, 7
    %v117 = vsub.s32 3, %v116
    %v118 = vrot.slane %v101, %v117
    %v131 = vunpack.c.l.b16 %v93
    %v132 = vunpack.c.h.b16 %v93
    %v133 = vunpack.c.l.b16 %v94
    %v134 = vunpack.c.h.b16 %v94
    %v135 = vunpack.c.l.b16 %v95
    %v136 = vunpack.c.h.b16 %v95
    %v137 = vunpack.c.l.b16 %v96
    %v138 = vunpack.c.h.b16 %v96
    %v139 = vunpack.c.l.b16 %v97
    %v140 = vunpack.c.h.b16 %v97
    %v141 = vunpack.c.l.b16 %v98
    %v142 = vunpack.c.h.b16 %v98
    %v143 = vunpack.c.l.b16 %v99
    %v144 = vunpack.c.h.b16 %v99
    %v145 = vunpack.c.l.b16 %v100
    %v146 = vunpack.c.h.b16 %v100
    %v147 = vpack.c.b16 %v135, %v131
    %v148 = vpack.c.b16 %v136, %v132
    %v149 = vpack.c.b16 %v137, %v133
    %v150 = vpack.c.b16 %v138, %v134
    %v151 = vpack.c.b16 %v143, %v139
    %v152 = vpack.c.b16 %v144, %v140
    %v153 = vpack.c.b16 %v145, %v141
    %v154 = vpack.c.b16 %v146, %v142
    %vm163 = vcmask 261120
    %v165 = vsel %vm163, %v92, 0
    %167 = vmatprep.subr.bf16.mxu0 0
    %168 = vmatpush1.bf16.msra.mxu0 0
    %169 = vmatprep.subr.bf16.mxu0 0
    %170 = vmatpush1.bf16.msra.mxu0 0
    %171 = vmatprep.subr.bf16.mxu0 0
    %172 = vmatpush1.bf16.msra.mxu0 0
    %173 = vmatprep.subr.bf16.mxu0 0
    %174 = vmatpush1.bf16.msra.mxu0 0
    %175 = vmatprep.subr.bf16.mxu0 0
    %176 = vmatpush1.bf16.msra.mxu0 0
    %177 = vmatprep.subr.bf16.mxu0 0
    %178 = vmatpush1.bf16.msra.mxu0 0
    %179 = vmatprep.subr.bf16.mxu0 %v152
    %180 = vmatpush1.bf16.msra.mxu0 %v151
    %181 = vmatprep.subr.bf16.mxu0 %v148
    %182 = vmatpush1.bf16.msra.mxu0 %v147
    %183 = vmatprep.subr.bf16.mxu0 0
    %184 = vmatpush2.bf16.msra.mxu0 0
    %185 = vmatprep.subr.bf16.mxu0 0
    %186 = vmatpush2.bf16.msra.mxu0 0
    %187 = vmatprep.subr.bf16.mxu0 0
    %188 = vmatpush2.bf16.msra.mxu0 0
    %189 = vmatprep.subr.bf16.mxu0 0
    %190 = vmatpush2.bf16.msra.mxu0 0
    %191 = vmatprep.subr.bf16.mxu0 0
    %192 = vmatpush2.bf16.msra.mxu0 0
    %193 = vmatprep.subr.bf16.mxu0 0
    %194 = vmatpush2.bf16.msra.mxu0 0
    %195 = vmatprep.subr.bf16.mxu0 0
    %196 = vmatpush2.bf16.msra.mxu0 0
    %197 = vmatprep.subr.bf16.mxu0 0
    %198 = vmatpush2.bf16.msra.mxu0 0
    %199 = vmatprep.mubr.bf16.mxu0 0
    %200 = vmatmul.mubr.bf16.gmra.mxu0 %v165
    %v201 = vpop.f32.mrf.mxu0
    %v202 = vadd.f32 %v106, %v201
    %v203 = vpop.f32.mrf.mxu0
    %v204 = vadd.f32 %v110, %v203
    %v205 = vpop.f32.mrf.mxu0
    %v206 = vpop.f32.mrf.mxu0
    %207 = vdwg.mxu0
    %208 = vmatprep.subr.bf16.mxu0 0
    %209 = vmatpush1.bf16.msra.mxu0 0
    %210 = vmatprep.subr.bf16.mxu0 0
    %211 = vmatpush1.bf16.msra.mxu0 0
    %212 = vmatprep.subr.bf16.mxu0 0
    %213 = vmatpush1.bf16.msra.mxu0 0
    %214 = vmatprep.subr.bf16.mxu0 0
    %215 = vmatpush1.bf16.msra.mxu0 0
    %216 = vmatprep.subr.bf16.mxu0 0
    %217 = vmatpush1.bf16.msra.mxu0 0
    %218 = vmatprep.subr.bf16.mxu0 0
    %219 = vmatpush1.bf16.msra.mxu0 0
    %220 = vmatprep.subr.bf16.mxu0 %v154
    %221 = vmatpush1.bf16.msra.mxu0 %v153
    %222 = vmatprep.subr.bf16.mxu0 %v150
    %223 = vmatpush1.bf16.msra.mxu0 %v149
    %224 = vmatprep.subr.bf16.mxu0 0
    %225 = vmatpush2.bf16.msra.mxu0 0
    %226 = vmatprep.subr.bf16.mxu0 0
    %227 = vmatpush2.bf16.msra.mxu0 0
    %228 = vmatprep.subr.bf16.mxu0 0
    %229 = vmatpush2.bf16.msra.mxu0 0
    %230 = vmatprep.subr.bf16.mxu0 0
    %231 = vmatpush2.bf16.msra.mxu0 0
    %232 = vmatprep.subr.bf16.mxu0 0
    %233 = vmatpush2.bf16.msra.mxu0 0
    %234 = vmatprep.subr.bf16.mxu0 0
    %235 = vmatpush2.bf16.msra.mxu0 0
    %236 = vmatprep.subr.bf16.mxu0 0
    %237 = vmatpush2.bf16.msra.mxu0 0
    %238 = vmatprep.subr.bf16.mxu0 0
    %239 = vmatpush2.bf16.msra.mxu0 0
    %240 = vmatprep.mubr.bf16.mxu0 0
    %241 = vmatmul.mubr.bf16.gmra.mxu0 %v165
    %v242 = vpop.f32.mrf.mxu0
    %v243 = vadd.f32 %v114, %v242
    %v244 = vpop.f32.mrf.mxu0
    %v245 = vadd.f32 %v118, %v244
    %v246 = vpop.f32.mrf.mxu0
    %v247 = vpop.f32.mrf.mxu0
    %248 = vdwg.mxu0
    %v249 = vpack.c.bf16 %v202, %v202
    %v250 = vpack.c.bf16 %v204, %v204
    %v251 = vpack.c.bf16 %v243, %v243
    %v252 = vpack.c.bf16 %v245, %v245
    %v253 = vld [vmem:[#allocation8] sm:$0xff]
    %v254 = vld [vmem:[#allocation8 + $0x8] sm:$0xff]
    %v255 = vld [vmem:[#allocation8 + $0x10] sm:$0xff]
    %v256 = vld [vmem:[#allocation8 + $0x18] sm:$0xff]
    %v257 = vld [vmem:[#allocation8 + $0x20] sm:$0xff]
    %v258 = vld [vmem:[#allocation8 + $0x28] sm:$0xff]
    %v259 = vld [vmem:[#allocation8 + $0x30] sm:$0xff]
    %v260 = vld [vmem:[#allocation8 + $0x38] sm:$0xff]
    %v261 = vld [vmem:[#allocation8 + $0x40] sm:$0xff]
    %v262 = vld [vmem:[#allocation8 + $0x48] sm:$0xff]
    %v263 = vld [vmem:[#allocation8 + $0x50] sm:$0xff]
    %v264 = vld [vmem:[#allocation8 + $0x58] sm:$0xff]
    %v265 = vld [vmem:[#allocation8 + $0x60] sm:$0xff]
    %v266 = vld [vmem:[#allocation8 + $0x68] sm:$0xff]
    %v267 = vld [vmem:[#allocation8 + $0x70] sm:$0xff]
    %v268 = vld [vmem:[#allocation8 + $0x78] sm:$0xff]
    %v269 = vld [vmem:[#allocation8 + $0x80] sm:$0xff]
    %v270 = vld [vmem:[#allocation8 + $0x88] sm:$0xff]
    %v271 = vld [vmem:[#allocation8 + $0x90] sm:$0xff]
    %v272 = vld [vmem:[#allocation8 + $0x98] sm:$0xff]
    %v273 = vld [vmem:[#allocation8 + $0xa0] sm:$0xff]
    %v274 = vld [vmem:[#allocation8 + $0xa8] sm:$0xff]
    %v275 = vld [vmem:[#allocation8 + $0xb0] sm:$0xff]
    %v276 = vld [vmem:[#allocation8 + $0xb8] sm:$0xff]
    %v277 = vld [vmem:[#allocation8 + $0xc0] sm:$0xff]
    %v278 = vld [vmem:[#allocation8 + $0xc8] sm:$0xff]
    %v279 = vld [vmem:[#allocation8 + $0xd0] sm:$0xff]
    %v280 = vld [vmem:[#allocation8 + $0xd8] sm:$0xff]
    %v281 = vld [vmem:[#allocation8 + $0xe0] sm:$0xff]
    %v282 = vld [vmem:[#allocation8 + $0xe8] sm:$0xff]
    %v283 = vld [vmem:[#allocation8 + $0xf0] sm:$0xff]
    %v284 = vld [vmem:[#allocation8 + $0xf8] sm:$0xff]
    %v285 = vld [vmem:[#allocation8 + $0x100] sm:$0xff]
    %v286 = vld [vmem:[#allocation8 + $0x108] sm:$0xff]
    %v287 = vld [vmem:[#allocation8 + $0x110] sm:$0xff]
    %v288 = vld [vmem:[#allocation8 + $0x118] sm:$0xff]
    %v289 = vld [vmem:[#allocation8 + $0x120] sm:$0xff]
    %v290 = vld [vmem:[#allocation8 + $0x128] sm:$0xff]
    %v291 = vld [vmem:[#allocation8 + $0x130] sm:$0xff]
    %v292 = vld [vmem:[#allocation8 + $0x138] sm:$0xff]
    %v293 = vld [vmem:[#allocation8 + $0x140] sm:$0xff]
    %v294 = vld [vmem:[#allocation8 + $0x148] sm:$0xff]
    %v295 = vld [vmem:[#allocation8 + $0x150] sm:$0xff]
    %v296 = vld [vmem:[#allocation8 + $0x158] sm:$0xff]
    %v297 = vld [vmem:[#allocation8 + $0x160] sm:$0xff]
    %v298 = vld [vmem:[#allocation8 + $0x168] sm:$0xff]
    %v299 = vld [vmem:[#allocation8 + $0x170] sm:$0xff]
    %v300 = vld [vmem:[#allocation8 + $0x178] sm:$0xff]
    %v301 = vld [vmem:[#allocation8 + $0x180] sm:$0xff]
    %v302 = vld [vmem:[#allocation8 + $0x188] sm:$0xff]
    %v303 = vld [vmem:[#allocation8 + $0x190] sm:$0xff]
    %v304 = vld [vmem:[#allocation8 + $0x198] sm:$0xff]
    %v305 = vld [vmem:[#allocation8 + $0x1a0] sm:$0xff]
    %v306 = vld [vmem:[#allocation8 + $0x1a8] sm:$0xff]
    %v307 = vld [vmem:[#allocation8 + $0x1b0] sm:$0xff]
    %v308 = vld [vmem:[#allocation8 + $0x1b8] sm:$0xff]
    %v309 = vld [vmem:[#allocation8 + $0x1c0] sm:$0xff]
    %v310 = vld [vmem:[#allocation8 + $0x1c8] sm:$0xff]
    %v311 = vld [vmem:[#allocation8 + $0x1d0] sm:$0xff]
    %v312 = vld [vmem:[#allocation8 + $0x1d8] sm:$0xff]
    %v313 = vld [vmem:[#allocation8 + $0x1e0] sm:$0xff]
    %v314 = vld [vmem:[#allocation8 + $0x1e8] sm:$0xff]
    %v315 = vld [vmem:[#allocation8 + $0x1f0] sm:$0xff]
    %v316 = vld [vmem:[#allocation8 + $0x1f8] sm:$0xff]
    %v317 = vld [vmem:[#allocation10] sm:$0x3]
    %v319 = vlaneseq
    %v320 = vshrl.u32 %v319, 7
    %v321 = vsub.s32 0, %v320
    %v322 = vrot.slane %v317, %v321
    %v323 = vlaneseq
    %v324 = vshrl.u32 %v323, 7
    %v325 = vsub.s32 1, %v324
    %v326 = vrot.slane %v317, %v325
    %v393 = vunpack.c.l.b16 %v253
    %v394 = vunpack.c.h.b16 %v253
    %v395 = vunpack.c.l.b16 %v254
    %v396 = vunpack.c.h.b16 %v254
    %v397 = vunpack.c.l.b16 %v255
    %v398 = vunpack.c.h.b16 %v255
    %v399 = vunpack.c.l.b16 %v256
    %v400 = vunpack.c.h.b16 %v256
    %v401 = vunpack.c.l.b16 %v257
    %v402 = vunpack.c.h.b16 %v257
    %v403 = vunpack.c.l.b16 %v258
    %v404 = vunpack.c.h.b16 %v258
    %v405 = vunpack.c.l.b16 %v259
    %v406 = vunpack.c.h.b16 %v259
    %v407 = vunpack.c.l.b16 %v260
    %v408 = vunpack.c.h.b16 %v260
    %v409 = vunpack.c.l.b16 %v261
    %v410 = vunpack.c.h.b16 %v261
    %v411 = vunpack.c.l.b16 %v262
    %v412 = vunpack.c.h.b16 %v262
    %v413 = vunpack.c.l.b16 %v263
    %v414 = vunpack.c.h.b16 %v263
    %v415 = vunpack.c.l.b16 %v264
    %v416 = vunpack.c.h.b16 %v264
    %v417 = vunpack.c.l.b16 %v265
    %v418 = vunpack.c.h.b16 %v265
    %v419 = vunpack.c.l.b16 %v266
    %v420 = vunpack.c.h.b16 %v266
    %v421 = vunpack.c.l.b16 %v267
    %v422 = vunpack.c.h.b16 %v267
    %v423 = vunpack.c.l.b16 %v268
    %v424 = vunpack.c.h.b16 %v268
    %v425 = vunpack.c.l.b16 %v269
    %v426 = vunpack.c.h.b16 %v269
    %v427 = vunpack.c.l.b16 %v270
    %v428 = vunpack.c.h.b16 %v270
    %v429 = vunpack.c.l.b16 %v271
    %v430 = vunpack.c.h.b16 %v271
    %v431 = vunpack.c.l.b16 %v272
    %v432 = vunpack.c.h.b16 %v272
    %v433 = vunpack.c.l.b16 %v273
    %v434 = vunpack.c.h.b16 %v273
    %v435 = vunpack.c.l.b16 %v274
    %v436 = vunpack.c.h.b16 %v274
    %v437 = vunpack.c.l.b16 %v275
    %v438 = vunpack.c.h.b16 %v275
    %v439 = vunpack.c.l.b16 %v276
    %v440 = vunpack.c.h.b16 %v276
    %v441 = vunpack.c.l.b16 %v277
    %v442 = vunpack.c.h.b16 %v277
    %v443 = vunpack.c.l.b16 %v278
    %v444 = vunpack.c.h.b16 %v278
    %v445 = vunpack.c.l.b16 %v279
    %v446 = vunpack.c.h.b16 %v279
    %v447 = vunpack.c.l.b16 %v280
    %v448 = vunpack.c.h.b16 %v280
    %v449 = vunpack.c.l.b16 %v281
    %v450 = vunpack.c.h.b16 %v281
    %v451 = vunpack.c.l.b16 %v282
    %v452 = vunpack.c.h.b16 %v282
    %v453 = vunpack.c.l.b16 %v283
    %v454 = vunpack.c.h.b16 %v283
    %v455 = vunpack.c.l.b16 %v284
    %v456 = vunpack.c.h.b16 %v284
    %v457 = vunpack.c.l.b16 %v285
    %v458 = vunpack.c.h.b16 %v285
    %v459 = vunpack.c.l.b16 %v286
    %v460 = vunpack.c.h.b16 %v286
    %v461 = vunpack.c.l.b16 %v287
    %v462 = vunpack.c.h.b16 %v287
    %v463 = vunpack.c.l.b16 %v288
    %v464 = vunpack.c.h.b16 %v288
    %v465 = vunpack.c.l.b16 %v289
    %v466 = vunpack.c.h.b16 %v289
    %v467 = vunpack.c.l.b16 %v290
    %v468 = vunpack.c.h.b16 %v290
    %v469 = vunpack.c.l.b16 %v291
    %v470 = vunpack.c.h.b16 %v291
    %v471 = vunpack.c.l.b16 %v292
    %v472 = vunpack.c.h.b16 %v292
    %v473 = vunpack.c.l.b16 %v293
    %v474 = vunpack.c.h.b16 %v293
    %v475 = vunpack.c.l.b16 %v294
    %v476 = vunpack.c.h.b16 %v294
    %v477 = vunpack.c.l.b16 %v295
    %v478 = vunpack.c.h.b16 %v295
    %v479 = vunpack.c.l.b16 %v296
    %v480 = vunpack.c.h.b16 %v296
    %v481 = vunpack.c.l.b16 %v297
    %v482 = vunpack.c.h.b16 %v297
    %v483 = vunpack.c.l.b16 %v298
    %v484 = vunpack.c.h.b16 %v298
    %v485 = vunpack.c.l.b16 %v299
    %v486 = vunpack.c.h.b16 %v299
    %v487 = vunpack.c.l.b16 %v300
    %v488 = vunpack.c.h.b16 %v300
    %v489 = vunpack.c.l.b16 %v301
    %v490 = vunpack.c.h.b16 %v301
    %v491 = vunpack.c.l.b16 %v302
    %v492 = vunpack.c.h.b16 %v302
    %v493 = vunpack.c.l.b16 %v303
    %v494 = vunpack.c.h.b16 %v303
    %v495 = vunpack.c.l.b16 %v304
    %v496 = vunpack.c.h.b16 %v304
    %v497 = vunpack.c.l.b16 %v305
    %v498 = vunpack.c.h.b16 %v305
    %v499 = vunpack.c.l.b16 %v306
    %v500 = vunpack.c.h.b16 %v306
    %v501 = vunpack.c.l.b16 %v307
    %v502 = vunpack.c.h.b16 %v307
    %v503 = vunpack.c.l.b16 %v308
    %v504 = vunpack.c.h.b16 %v308
    %v505 = vunpack.c.l.b16 %v309
    %v506 = vunpack.c.h.b16 %v309
    %v507 = vunpack.c.l.b16 %v310
    %v508 = vunpack.c.h.b16 %v310
    %v509 = vunpack.c.l.b16 %v311
    %v510 = vunpack.c.h.b16 %v311
    %v511 = vunpack.c.l.b16 %v312
    %v512 = vunpack.c.h.b16 %v312
    %v513 = vunpack.c.l.b16 %v313
    %v514 = vunpack.c.h.b16 %v313
    %v515 = vunpack.c.l.b16 %v314
    %v516 = vunpack.c.h.b16 %v314
    %v517 = vunpack.c.l.b16 %v315
    %v518 = vunpack.c.h.b16 %v315
    %v519 = vunpack.c.l.b16 %v316
    %v520 = vunpack.c.h.b16 %v316
    %v521 = vpack.c.b16 %v395, %v393
    %v522 = vpack.c.b16 %v396, %v394
    %v523 = vpack.c.b16 %v399, %v397
    %v524 = vpack.c.b16 %v400, %v398
    %v525 = vpack.c.b16 %v403, %v401
    %v526 = vpack.c.b16 %v404, %v402
    %v527 = vpack.c.b16 %v407, %v405
    %v528 = vpack.c.b16 %v408, %v406
    %v529 = vpack.c.b16 %v411, %v409
    %v530 = vpack.c.b16 %v412, %v410
    %v531 = vpack.c.b16 %v415, %v413
    %v532 = vpack.c.b16 %v416, %v414
    %v533 = vpack.c.b16 %v419, %v417
    %v534 = vpack.c.b16 %v420, %v418
    %v535 = vpack.c.b16 %v423, %v421
    %v536 = vpack.c.b16 %v424, %v422
    %v537 = vpack.c.b16 %v427, %v425
    %v538 = vpack.c.b16 %v428, %v426
    %v539 = vpack.c.b16 %v431, %v429
    %v540 = vpack.c.b16 %v432, %v430
    %v541 = vpack.c.b16 %v435, %v433
    %v542 = vpack.c.b16 %v436, %v434
    %v543 = vpack.c.b16 %v439, %v437
    %v544 = vpack.c.b16 %v440, %v438
    %v545 = vpack.c.b16 %v443, %v441
    %v546 = vpack.c.b16 %v444, %v442
    %v547 = vpack.c.b16 %v447, %v445
    %v548 = vpack.c.b16 %v448, %v446
    %v549 = vpack.c.b16 %v451, %v449
    %v550 = vpack.c.b16 %v452, %v450
    %v551 = vpack.c.b16 %v455, %v453
    %v552 = vpack.c.b16 %v456, %v454
    %v553 = vpack.c.b16 %v459, %v457
    %v554 = vpack.c.b16 %v460, %v458
    %v555 = vpack.c.b16 %v463, %v461
    %v556 = vpack.c.b16 %v464, %v462
    %v557 = vpack.c.b16 %v467, %v465
    %v558 = vpack.c.b16 %v468, %v466
    %v559 = vpack.c.b16 %v471, %v469
    %v560 = vpack.c.b16 %v472, %v470
    %v561 = vpack.c.b16 %v475, %v473
    %v562 = vpack.c.b16 %v476, %v474
    %v563 = vpack.c.b16 %v479, %v477
    %v564 = vpack.c.b16 %v480, %v478
    %v565 = vpack.c.b16 %v483, %v481
    %v566 = vpack.c.b16 %v484, %v482
    %v567 = vpack.c.b16 %v487, %v485
    %v568 = vpack.c.b16 %v488, %v486
    %v569 = vpack.c.b16 %v491, %v489
    %v570 = vpack.c.b16 %v492, %v490
    %v571 = vpack.c.b16 %v495, %v493
    %v572 = vpack.c.b16 %v496, %v494
    %v573 = vpack.c.b16 %v499, %v497
    %v574 = vpack.c.b16 %v500, %v498
    %v575 = vpack.c.b16 %v503, %v501
    %v576 = vpack.c.b16 %v504, %v502
    %v577 = vpack.c.b16 %v507, %v505
    %v578 = vpack.c.b16 %v508, %v506
    %v579 = vpack.c.b16 %v511, %v509
    %v580 = vpack.c.b16 %v512, %v510
    %v581 = vpack.c.b16 %v515, %v513
    %v582 = vpack.c.b16 %v516, %v514
    %v583 = vpack.c.b16 %v519, %v517
    %v584 = vpack.c.b16 %v520, %v518
    %649 = vmatprep.subr.bf16.mxu0 %v536
    %650 = vmatpush1.bf16.msra.mxu0 %v535
    %651 = vmatprep.subr.bf16.mxu0 %v534
    %652 = vmatpush1.bf16.msra.mxu0 %v533
    %653 = vmatprep.subr.bf16.mxu0 %v532
    %654 = vmatpush1.bf16.msra.mxu0 %v531
    %655 = vmatprep.subr.bf16.mxu0 %v530
    %656 = vmatpush1.bf16.msra.mxu0 %v529
    %657 = vmatprep.subr.bf16.mxu0 %v528
    %658 = vmatpush1.bf16.msra.mxu0 %v527
    %659 = vmatprep.subr.bf16.mxu0 %v526
    %660 = vmatpush1.bf16.msra.mxu0 %v525
    %661 = vmatprep.subr.bf16.mxu0 %v524
    %662 = vmatpush1.bf16.msra.mxu0 %v523
    %663 = vmatprep.subr.bf16.mxu0 %v522
    %664 = vmatpush1.bf16.msra.mxu0 %v521
    %665 = vmatprep.subr.bf16.mxu0 %v552
    %666 = vmatpush2.bf16.msra.mxu0 %v551
    %667 = vmatprep.subr.bf16.mxu0 %v550
    %668 = vmatpush2.bf16.msra.mxu0 %v549
    %669 = vmatprep.subr.bf16.mxu0 %v548
    %670 = vmatpush2.bf16.msra.mxu0 %v547
    %671 = vmatprep.subr.bf16.mxu0 %v546
    %672 = vmatpush2.bf16.msra.mxu0 %v545
    %673 = vmatprep.subr.bf16.mxu0 %v544
    %674 = vmatpush2.bf16.msra.mxu0 %v543
    %675 = vmatprep.subr.bf16.mxu0 %v542
    %676 = vmatpush2.bf16.msra.mxu0 %v541
    %677 = vmatprep.subr.bf16.mxu0 %v540
    %678 = vmatpush2.bf16.msra.mxu0 %v539
    %679 = vmatprep.subr.bf16.mxu0 %v538
    %680 = vmatpush2.bf16.msra.mxu0 %v537
    %681 = vmatprep.mubr.bf16.mxu0 %v250
    %682 = vmatmul.mubr.bf16.gmra.mxu0 %v249
    %v683 = vpop.f32.mrf.mxu0
    %v684 = vadd.f32 %v322, %v683
    %v685 = vpop.f32.mrf.mxu0
    %v686 = vadd.f32 %v326, %v685
    %v687 = vpop.f32.mrf.mxu0
    %v688 = vpop.f32.mrf.mxu0
    %689 = vdwg.mxu0
    %690 = vmatprep.subr.bf16.mxu0 %v568
    %691 = vmatpush1.bf16.msra.mxu0 %v567
    %692 = vmatprep.subr.bf16.mxu0 %v566
    %693 = vmatpush1.bf16.msra.mxu0 %v565
    %694 = vmatprep.subr.bf16.mxu0 %v564
    %695 = vmatpush1.bf16.msra.mxu0 %v563
    %696 = vmatprep.subr.bf16.mxu0 %v562
    %697 = vmatpush1.bf16.msra.mxu0 %v561
    %698 = vmatprep.subr.bf16.mxu0 %v560
    %699 = vmatpush1.bf16.msra.mxu0 %v559
    %700 = vmatprep.subr.bf16.mxu0 %v558
    %701 = vmatpush1.bf16.msra.mxu0 %v557
    %702 = vmatprep.subr.bf16.mxu0 %v556
    %703 = vmatpush1.bf16.msra.mxu0 %v555
    %704 = vmatprep.subr.bf16.mxu0 %v554
    %705 = vmatpush1.bf16.msra.mxu0 %v553
    %706 = vmatprep.subr.bf16.mxu0 %v584
    %707 = vmatpush2.bf16.msra.mxu0 %v583
    %708 = vmatprep.subr.bf16.mxu0 %v582
    %709 = vmatpush2.bf16.msra.mxu0 %v581
    %710 = vmatprep.subr.bf16.mxu0 %v580
    %711 = vmatpush2.bf16.msra.mxu0 %v579
    %712 = vmatprep.subr.bf16.mxu0 %v578
    %713 = vmatpush2.bf16.msra.mxu0 %v577
    %714 = vmatprep.subr.bf16.mxu0 %v576
    %715 = vmatpush2.bf16.msra.mxu0 %v575
    %716 = vmatprep.subr.bf16.mxu0 %v574
    %717 = vmatpush2.bf16.msra.mxu0 %v573
    %718 = vmatprep.subr.bf16.mxu0 %v572
    %719 = vmatpush2.bf16.msra.mxu0 %v571
    %720 = vmatprep.subr.bf16.mxu0 %v570
    %721 = vmatpush2.bf16.msra.mxu0 %v569
    %722 = vmatprep.mubr.bf16.mxu0 %v252
    %723 = vmatmul.mubr.bf16.gmra.mxu0 %v251
    %v724 = vpop.f32.mrf.mxu0
    %v725 = vadd.f32 %v684, %v724
    %v726 = vpop.f32.mrf.mxu0
    %v727 = vadd.f32 %v686, %v726
    %v728 = vpop.f32.mrf.mxu0
    %v729 = vpop.f32.mrf.mxu0
    %730 = vdwg.mxu0
    %v731 = vld [vmem:[%s5] sm:$0xff]
    %v732 = vmul.f32 %v727, 0.5
    %v733 = vmul.f32 %v732, 1.442695
    %v734 = vpow.pop %v733
    %v735 = vmul.f32 %v731, %v734
    %v736 = vadd.f32 %v725, %v735
    %vm737 = vcmask 130048
    %738 = vst.msk [vmem:[#allocation11] sm:$0xff] %vm737, %v736
    %739 = vst.msk [vmem:[#allocation12] sm:$0xff] %vm737, %v725
    %740 = vst.msk [vmem:[#allocation14] sm:$0xff] %vm737, %v727
    // Predicated region
    $region46: #{tpu_custom_call.1} parent=1 // pred_check
      _
    $region47: #{tpu_custom_call.1} parent=1 // pred_check_branch
      %742 = sbr.rel (0) target = $region49
    $region48: #{tpu_custom_call.1} parent=1 // pred_region
      %s744 = ssub.s32 128, 128
      %745 = vsyncadd [#allocation4], %s744
      %s747 = sshll.u32 [#allocation11], 4
      %s748 = int_to_ptr.vmem [resolvable:$true] %s747
      %750 = dma.vmem_to_hbm [thread:$0]  %s748, 128, %s6, [#allocation4]
    $region49: #{tpu_custom_call.1} parent=1 // pred_fallthru
      _
    // Predicated region
    $region50: #{tpu_custom_call.1} parent=1 // pred_check
      _
    $region51: #{tpu_custom_call.1} parent=1 // pred_check_branch
      %752 = sbr.rel (0) target = $region53
    $region52: #{tpu_custom_call.1} parent=1 // pred_region
      %s754 = ssub.s32 128, 128
      %755 = vsyncadd [#allocation13], %s754
      %s757 = sshll.u32 [#allocation12], 4
      %s758 = int_to_ptr.vmem [resolvable:$true] %s757
      %760 = dma.vmem_to_hbm [thread:$0]  %s758, 128, %s7, [#allocation13]
    $region53: #{tpu_custom_call.1} parent=1 // pred_fallthru
      _
    // Predicated region
    $region54: #{tpu_custom_call.1} parent=1 // pred_check
      _
    $region55: #{tpu_custom_call.1} parent=1 // pred_check_branch
      %762 = sbr.rel (0) target = $region57
    $region56: #{tpu_custom_call.1} parent=1 // pred_region
      %s764 = ssub.s32 128, 128
      %765 = vsyncadd [#allocation13], %s764
      %s767 = sshll.u32 [#allocation14], 4
      %s768 = int_to_ptr.vmem [resolvable:$true] %s767
      %770 = dma.vmem_to_hbm [thread:$0]  %s768, 128, %s8, [#allocation13]
    $region57: #{tpu_custom_call.1} parent=1 // pred_fallthru
      _
    // Predicated region
    $region58: #{tpu_custom_call.1} parent=1 // pred_check
      _
    $region59: #{tpu_custom_call.1} parent=1 // pred_check_branch
      %772 = sbr.rel (0) target = $region61
    $region60: #{tpu_custom_call.1} parent=1 // pred_region
      %773 = dma.done [#allocation4], 128
    $region61: #{tpu_custom_call.1} parent=1 // pred_fallthru
      _
    // Predicated region
    $region62: #{tpu_custom_call.1} parent=1 // pred_check
      _
    $region63: #{tpu_custom_call.1} parent=1 // pred_check_branch
      %775 = sbr.rel (0) target = $region65
    $region64: #{tpu_custom_call.1} parent=1 // pred_region
      %776 = dma.done [#allocation13], 128
    $region65: #{tpu_custom_call.1} parent=1 // pred_fallthru
      _
    // Predicated region
    $region66: #{tpu_custom_call.1} parent=1 // pred_check
      _
    $region67: #{tpu_custom_call.1} parent=1 // pred_check_branch
      %778 = sbr.rel (0) target = $region69
    $region68: #{tpu_custom_call.1} parent=1 // pred_region
      %779 = dma.done [#allocation13], 128
    $region69: #{tpu_custom_call.1} parent=1 // pred_fallthru
      _
    %780 = vsyncpa [#allocation3], 1
    %781 = vsyncpa [#allocation6], 1
    %782 = vsyncpa [#allocation9], 1
    %783 = vsyncpa [#allocation4], 1
    %784 = vsyncpa [#allocation13], 1

// kernel: tpu_custom_call.1
$region0: #{tpu_custom_call.1}
  #allocation0 [shape = 'u32[]', space=smem, size = 0x4, offset = 0x4, fixed_abs, tag = 'smem constant byte address 0x4 - core index']
  #allocation1 [shape = 'u32[144,128]{1,0:T(1,128)}', space=vmem, size = 0x12000, scoped, tag = 'internal scratch']
  %s0 = inlined_call_operand.hbm [shape: f32[8,32], index: 0, kind: input, shape index: {}]
  %s1 = inlined_call_operand.hbm [shape: bf16[32,512], index: 1, kind: input, shape index: {}]
  %s2 = inlined_call_operand.hbm [shape: f32[1,512], index: 2, kind: input, shape index: {}]
  %s3 = inlined_call_operand.hbm [shape: bf16[512,256], index: 3, kind: input, shape index: {}]
  %s4 = inlined_call_operand.hbm [shape: f32[1,256], index: 4, kind: input, shape index: {}]
  %s5 = inlined_call_operand.vmem [shape: f32[8,16], index: 5, kind: input, shape index: {}]
  %s6 = inlined_call_operand.hbm [shape: f32[8,16], index: 6, kind: output, shape index: {0}]
  %s7 = inlined_call_operand.hbm [shape: f32[8,16], index: 7, kind: output, shape index: {1}]
  %s8 = inlined_call_operand.hbm [shape: f32[8,16], index: 8, kind: output, shape index: {2}]
  %9 = xla_tuple %s6, %s7, %s8
  %s10 = sld [smem:[#allocation0]]
  $region70: #{tpu_custom_call.1} parent=0
    _
  %s12 = ssub.s32 1, %s10
  %s13 = scalar_select 0, %s12, %s10
  $region1: #{tpu_custom_call.1} parent=0
    #allocation2 [shape = 'u8[4096]{0}', space=vmem, size = 0x1000, scoped, tag = 'input window, operand 0, single buffered']
    #allocation3 [shape = 's32[1]{0}', space=sflag, size = 0x4, scoped, tag = 'scoped memory for tpu_custom_call.1']
    #allocation4 [shape = 's32[1]{0}', space=sflag, size = 0x4, scoped, tag = 'scoped memory for tpu_custom_call.1']
    #allocation5 [shape = 'u8[32768]{0}', space=vmem, size = 0x8000, scoped, tag = 'input window, operand 1, single buffered']
    #allocation6 [shape = 's32[1]{0}', space=sflag, size = 0x4, scoped, tag = 'scoped memory for tpu_custom_call.1']
    #allocation7 [shape = 'u8[2048]{0}', space=vmem, size = 0x800, scoped, tag = 'input window, operand 2, single buffered']
    #allocation8 [shape = 'u8[262144]{0}', space=vmem, size = 0x40000, scoped, tag = 'input window, operand 3, single buffered']
    #allocation9 [shape = 's32[1]{0}', space=sflag, size = 0x4, scoped, tag = 'scoped memory for tpu_custom_call.1']
    #allocation10 [shape = 'u8[1024]{0}', space=vmem, size = 0x400, scoped, tag = 'input window, operand 4, single buffered']
    #allocation11 [shape = 'u8[4096]{0}', space=vmem, size = 0x1000, scoped, tag = 'output window, operand 0, single buffered']
    #allocation12 [shape = 'u8[4096]{0}', space=vmem, size = 0x1000, scoped, tag = 'output window, operand 1, single buffered']
    #allocation13 [shape = 's32[1]{0}', space=sflag, size = 0x4, scoped, tag = 'scoped memory for tpu_custom_call.1']
    #allocation14 [shape = 'u8[4096]{0}', space=vmem, size = 0x1000, scoped, tag = 'output window, operand 2, single buffered']
    %14 = vsyncpa [#allocation3], 0
    %15 = vsyncpa [#allocation6], 0
    %16 = vsyncpa [#allocation9], 0
    %17 = vsyncpa [#allocation4], 0
    %18 = vsyncpa [#allocation13], 0
    // Predicated region
    $region2: #{tpu_custom_call.1} parent=1 // pred_check
      _
    $region3: #{tpu_custom_call.1} parent=1 // pred_check_branch
      %20 = sbr.rel (0) target = $region5
    $region4: #{tpu_custom_call.1} parent=1 // pred_region
      %s22 = ssub.s32 128, 128
      %23 = vsyncadd [#allocation3], %s22
      %s25 = sshll.u32 [#allocation2], 4
      %s26 = int_to_ptr.vmem [resolvable:$true] %s25
      %28 = dma.hbm_to_vmem [thread:$0]  %s0, 128, %s26, [#allocation3]
    $region5: #{tpu_custom_call.1} parent=1 // pred_fallthru
      _
    // Predicated region
    $region6: #{tpu_custom_call.1} parent=1 // pred_check
      _
    $region7: #{tpu_custom_call.1} parent=1 // pred_check_branch
      %30 = sbr.rel (0) target = $region9
    $region8: #{tpu_custom_call.1} parent=1 // pred_region
      %s32 = ssub.s32 1024, 1024
      %33 = vsyncadd [#allocation6], %s32
      %s34 = sshll.u32 [#allocation5], 4
      %s35 = int_to_ptr.vmem [resolvable:$true] %s34
      %40 = dma.hbm_to_vmem [thread:$0]  %s1, 1024, %s35, [#allocation6], 256, 256, 16
    $region9: #{tpu_custom_call.1} parent=1 // pred_fallthru
      _
    // Predicated region
    $region10: #{tpu_custom_call.1} parent=1 // pred_check
      _
    $region11: #{tpu_custom_call.1} parent=1 // pred_check_branch
      %42 = sbr.rel (0) target = $region13
    $region12: #{tpu_custom_call.1} parent=1 // pred_region
      %s44 = ssub.s32 64, 64
      %45 = vsyncadd [#allocation6], %s44
      %s47 = sshll.u32 [#allocation7], 4
      %s48 = int_to_ptr.vmem [resolvable:$true] %s47
      %50 = dma.hbm_to_vmem [thread:$0]  %s2, 64, %s48, [#allocation6]
    $region13: #{tpu_custom_call.1} parent=1 // pred_fallthru
      _
    // Predicated region
    $region14: #{tpu_custom_call.1} parent=1 // pred_check
      _
    $region15: #{tpu_custom_call.1} parent=1 // pred_check_branch
      %52 = sbr.rel (0) target = $region17
    $region16: #{tpu_custom_call.1} parent=1 // pred_region
      %s54 = ssub.s32 8192, 8192
      %55 = vsyncadd [#allocation9], %s54
      %s56 = sshll.u32 [#allocation8], 4
      %s57 = int_to_ptr.vmem [resolvable:$true] %s56
      %62 = dma.hbm_to_vmem [thread:$0]  %s3, 8192, %s57, [#allocation9], 128, 128, 8
    $region17: #{tpu_custom_call.1} parent=1 // pred_fallthru
      _
    // Predicated region
    $region18: #{tpu_custom_call.1} parent=1 // pred_check
      _
    $region19: #{tpu_custom_call.1} parent=1 // pred_check_branch
      %64 = sbr.rel (0) target = $region21
    $region20: #{tpu_custom_call.1} parent=1 // pred_region
      %s66 = ssub.s32 32, 32
      %67 = vsyncadd [#allocation9], %s66
      %s69 = sshll.u32 [#allocation10], 4
      %s70 = int_to_ptr.vmem [resolvable:$true] %s69
      %72 = dma.hbm_to_vmem [thread:$0]  %s4, 32, %s70, [#allocation9]
    $region21: #{tpu_custom_call.1} parent=1 // pred_fallthru
      _
    // Predicated region
    $region22: #{tpu_custom_call.1} parent=1 // pred_check
      _
    $region23: #{tpu_custom_call.1} parent=1 // pred_check_branch
      %74 = sbr.rel (0) target = $region25
    $region24: #{tpu_custom_call.1} parent=1 // pred_region
      _
    $region25: #{tpu_custom_call.1} parent=1 // pred_fallthru
      _
    // Predicated region
    $region26: #{tpu_custom_call.1} parent=1 // pred_check
      _
    $region27: #{tpu_custom_call.1} parent=1 // pred_check_branch
      %76 = sbr.rel (0) target = $region29
    $region28: #{tpu_custom_call.1} parent=1 // pred_region
      %77 = dma.done [#allocation3], 128
    $region29: #{tpu_custom_call.1} parent=1 // pred_fallthru
      _
    // Predicated region
    $region30: #{tpu_custom_call.1} parent=1 // pred_check
      _
    $region31: #{tpu_custom_call.1} parent=1 // pred_check_branch
      %79 = sbr.rel (0) target = $region33
    $region32: #{tpu_custom_call.1} parent=1 // pred_region
      %80 = dma.done [#allocation6], 1024
    $region33: #{tpu_custom_call.1} parent=1 // pred_fallthru
      _
    // Predicated region
    $region34: #{tpu_custom_call.1} parent=1 // pred_check
      _
    $region35: #{tpu_custom_call.1} parent=1 // pred_check_branch
      %82 = sbr.rel (0) target = $region37
    $region36: #{tpu_custom_call.1} parent=1 // pred_region
      %83 = dma.done [#allocation6], 64
    $region37: #{tpu_custom_call.1} parent=1 // pred_fallthru
      _
    // Predicated region
    $region38: #{tpu_custom_call.1} parent=1 // pred_check
      _
    $region39: #{tpu_custom_call.1} parent=1 // pred_check_branch
      %85 = sbr.rel (0) target = $region41
    $region40: #{tpu_custom_call.1} parent=1 // pred_region
      %86 = dma.done [#allocation9], 8192
    $region41: #{tpu_custom_call.1} parent=1 // pred_fallthru
      _
    // Predicated region
    $region42: #{tpu_custom_call.1} parent=1 // pred_check
      _
    $region43: #{tpu_custom_call.1} parent=1 // pred_check_branch
      %88 = sbr.rel (0) target = $region45
    $region44: #{tpu_custom_call.1} parent=1 // pred_region
      %89 = dma.done [#allocation9], 32
    $region45: #{tpu_custom_call.1} parent=1 // pred_fallthru
      _
    %v91 = vld [vmem:[#allocation2] sm:$0xff]
    %v92 = vpack.c.bf16 %v91, %v91
    %v93 = vld [vmem:[#allocation5] sm:$0xff]
    %v94 = vld [vmem:[#allocation5 + $0x8] sm:$0xff]
    %v95 = vld [vmem:[#allocation5 + $0x10] sm:$0xff]
    %v96 = vld [vmem:[#allocation5 + $0x18] sm:$0xff]
    %v97 = vld [vmem:[#allocation5 + $0x20] sm:$0xff]
    %v98 = vld [vmem:[#allocation5 + $0x28] sm:$0xff]
    %v99 = vld [vmem:[#allocation5 + $0x30] sm:$0xff]
    %v100 = vld [vmem:[#allocation5 + $0x38] sm:$0xff]
    %v101 = vld [vmem:[#allocation7] sm:$0xf]
    %v103 = vlaneseq
    %v104 = vshrl.u32 %v103, 7
    %v105 = vsub.s32 0, %v104
    %v106 = vrot.slane %v101, %v105
    %v107 = vlaneseq
    %v108 = vshrl.u32 %v107, 7
    %v109 = vsub.s32 1, %v108
    %v110 = vrot.slane %v101, %v109
    %v111 = vlaneseq
    %v112 = vshrl.u32 %v111, 7
    %v113 = vsub.s32 2, %v112
    %v114 = vrot.slane %v101, %v113
    %v115 = vlaneseq
    %v116 = vshrl.u32 %v115, 7
    %v117 = vsub.s32 3, %v116
    %v118 = vrot.slane %v101, %v117
    %v131 = vunpack.c.l.b16 %v93
    %v132 = vunpack.c.h.b16 %v93
    %v133 = vunpack.c.l.b16 %v94
    %v134 = vunpack.c.h.b16 %v94
    %v135 = vunpack.c.l.b16 %v95
    %v136 = vunpack.c.h.b16 %v95
    %v137 = vunpack.c.l.b16 %v96
    %v138 = vunpack.c.h.b16 %v96
    %v139 = vunpack.c.l.b16 %v97
    %v140 = vunpack.c.h.b16 %v97
    %v141 = vunpack.c.l.b16 %v98
    %v142 = vunpack.c.h.b16 %v98
    %v143 = vunpack.c.l.b16 %v99
    %v144 = vunpack.c.h.b16 %v99
    %v145 = vunpack.c.l.b16 %v100
    %v146 = vunpack.c.h.b16 %v100
    %v147 = vpack.c.b16 %v135, %v131
    %v148 = vpack.c.b16 %v136, %v132
    %v149 = vpack.c.b16 %v137, %v133
    %v150 = vpack.c.b16 %v138, %v134
    %v151 = vpack.c.b16 %v143, %v139
    %v152 = vpack.c.b16 %v144, %v140
    %v153 = vpack.c.b16 %v145, %v141
    %v154 = vpack.c.b16 %v146, %v142
    %vm163 = vcmask 261120
    %v165 = vsel %vm163, %v92, 0
    %167 = vmatprep.subr.bf16.mxu0 0
    %168 = vmatpush1.bf16.msra.mxu0 0
    %169 = vmatprep.subr.bf16.mxu0 0
    %170 = vmatpush1.bf16.msra.mxu0 0
    %171 = vmatprep.subr.bf16.mxu0 0
    %172 = vmatpush1.bf16.msra.mxu0 0
    %173 = vmatprep.subr.bf16.mxu0 0
    %174 = vmatpush1.bf16.msra.mxu0 0
    %175 = vmatprep.subr.bf16.mxu0 0
    %176 = vmatpush1.bf16.msra.mxu0 0
    %177 = vmatprep.subr.bf16.mxu0 0
    %178 = vmatpush1.bf16.msra.mxu0 0
    %179 = vmatprep.subr.bf16.mxu0 %v152
    %180 = vmatpush1.bf16.msra.mxu0 %v151
    %181 = vmatprep.subr.bf16.mxu0 %v148
    %182 = vmatpush1.bf16.msra.mxu0 %v147
    %183 = vmatprep.subr.bf16.mxu0 0
    %184 = vmatpush2.bf16.msra.mxu0 0
    %185 = vmatprep.subr.bf16.mxu0 0
    %186 = vmatpush2.bf16.msra.mxu0 0
    %187 = vmatprep.subr.bf16.mxu0 0
    %188 = vmatpush2.bf16.msra.mxu0 0
    %189 = vmatprep.subr.bf16.mxu0 0
    %190 = vmatpush2.bf16.msra.mxu0 0
    %191 = vmatprep.subr.bf16.mxu0 0
    %192 = vmatpush2.bf16.msra.mxu0 0
    %193 = vmatprep.subr.bf16.mxu0 0
    %194 = vmatpush2.bf16.msra.mxu0 0
    %195 = vmatprep.subr.bf16.mxu0 0
    %196 = vmatpush2.bf16.msra.mxu0 0
    %197 = vmatprep.subr.bf16.mxu0 0
    %198 = vmatpush2.bf16.msra.mxu0 0
    %199 = vmatprep.mubr.bf16.mxu0 0
    %200 = vmatmul.mubr.bf16.gmra.mxu0 %v165
    %v201 = vpop.f32.mrf.mxu0
    %v202 = vadd.f32 %v106, %v201
    %v203 = vpop.f32.mrf.mxu0
    %v204 = vadd.f32 %v110, %v203
    %v205 = vpop.f32.mrf.mxu0
    %v206 = vpop.f32.mrf.mxu0
    %207 = vdwg.mxu0
    %208 = vmatprep.subr.bf16.mxu0 0
    %209 = vmatpush1.bf16.msra.mxu0 0
    %210 = vmatprep.subr.bf16.mxu0 0
    %211 = vmatpush1.bf16.msra.mxu0 0
    %212 = vmatprep.subr.bf16.mxu0 0
    %213 = vmatpush1.bf16.msra.mxu0 0
    %214 = vmatprep.subr.bf16.mxu0 0
    %215 = vmatpush1.bf16.msra.mxu0 0
    %216 = vmatprep.subr.bf16.mxu0 0
    %217 = vmatpush1.bf16.msra.mxu0 0
    %218 = vmatprep.subr.bf16.mxu0 0
    %219 = vmatpush1.bf16.msra.mxu0 0
    %220 = vmatprep.subr.bf16.mxu0 %v154
    %221 = vmatpush1.bf16.msra.mxu0 %v153
    %222 = vmatprep.subr.bf16.mxu0 %v150
    %223 = vmatpush1.bf16.msra.mxu0 %v149
    %224 = vmatprep.subr.bf16.mxu0 0
    %225 = vmatpush2.bf16.msra.mxu0 0
    %226 = vmatprep.subr.bf16.mxu0 0
    %227 = vmatpush2.bf16.msra.mxu0 0
    %228 = vmatprep.subr.bf16.mxu0 0
    %229 = vmatpush2.bf16.msra.mxu0 0
    %230 = vmatprep.subr.bf16.mxu0 0
    %231 = vmatpush2.bf16.msra.mxu0 0
    %232 = vmatprep.subr.bf16.mxu0 0
    %233 = vmatpush2.bf16.msra.mxu0 0
    %234 = vmatprep.subr.bf16.mxu0 0
    %235 = vmatpush2.bf16.msra.mxu0 0
    %236 = vmatprep.subr.bf16.mxu0 0
    %237 = vmatpush2.bf16.msra.mxu0 0
    %238 = vmatprep.subr.bf16.mxu0 0
    %239 = vmatpush2.bf16.msra.mxu0 0
    %240 = vmatprep.mubr.bf16.mxu0 0
    %241 = vmatmul.mubr.bf16.gmra.mxu0 %v165
    %v242 = vpop.f32.mrf.mxu0
    %v243 = vadd.f32 %v114, %v242
    %v244 = vpop.f32.mrf.mxu0
    %v245 = vadd.f32 %v118, %v244
    %v246 = vpop.f32.mrf.mxu0
    %v247 = vpop.f32.mrf.mxu0
    %248 = vdwg.mxu0
    %v249 = vpack.c.bf16 %v202, %v202
    %v250 = vpack.c.bf16 %v204, %v204
    %v251 = vpack.c.bf16 %v243, %v243
    %v252 = vpack.c.bf16 %v245, %v245
    %v253 = vld [vmem:[#allocation8] sm:$0xff]
    %v254 = vld [vmem:[#allocation8 + $0x8] sm:$0xff]
    %v255 = vld [vmem:[#allocation8 + $0x10] sm:$0xff]
    %v256 = vld [vmem:[#allocation8 + $0x18] sm:$0xff]
    %v257 = vld [vmem:[#allocation8 + $0x20] sm:$0xff]
    %v258 = vld [vmem:[#allocation8 + $0x28] sm:$0xff]
    %v259 = vld [vmem:[#allocation8 + $0x30] sm:$0xff]
    %v260 = vld [vmem:[#allocation8 + $0x38] sm:$0xff]
    %v261 = vld [vmem:[#allocation8 + $0x40] sm:$0xff]
    %v262 = vld [vmem:[#allocation8 + $0x48] sm:$0xff]
    %v263 = vld [vmem:[#allocation8 + $0x50] sm:$0xff]
    %v264 = vld [vmem:[#allocation8 + $0x58] sm:$0xff]
    %v265 = vld [vmem:[#allocation8 + $0x60] sm:$0xff]
    %v266 = vld [vmem:[#allocation8 + $0x68] sm:$0xff]
    %v267 = vld [vmem:[#allocation8 + $0x70] sm:$0xff]
    %v268 = vld [vmem:[#allocation8 + $0x78] sm:$0xff]
    %v269 = vld [vmem:[#allocation8 + $0x80] sm:$0xff]
    %v270 = vld [vmem:[#allocation8 + $0x88] sm:$0xff]
    %v271 = vld [vmem:[#allocation8 + $0x90] sm:$0xff]
    %v272 = vld [vmem:[#allocation8 + $0x98] sm:$0xff]
    %v273 = vld [vmem:[#allocation8 + $0xa0] sm:$0xff]
    %v274 = vld [vmem:[#allocation8 + $0xa8] sm:$0xff]
    %v275 = vld [vmem:[#allocation8 + $0xb0] sm:$0xff]
    %v276 = vld [vmem:[#allocation8 + $0xb8] sm:$0xff]
    %v277 = vld [vmem:[#allocation8 + $0xc0] sm:$0xff]
    %v278 = vld [vmem:[#allocation8 + $0xc8] sm:$0xff]
    %v279 = vld [vmem:[#allocation8 + $0xd0] sm:$0xff]
    %v280 = vld [vmem:[#allocation8 + $0xd8] sm:$0xff]
    %v281 = vld [vmem:[#allocation8 + $0xe0] sm:$0xff]
    %v282 = vld [vmem:[#allocation8 + $0xe8] sm:$0xff]
    %v283 = vld [vmem:[#allocation8 + $0xf0] sm:$0xff]
    %v284 = vld [vmem:[#allocation8 + $0xf8] sm:$0xff]
    %v285 = vld [vmem:[#allocation8 + $0x100] sm:$0xff]
    %v286 = vld [vmem:[#allocation8 + $0x108] sm:$0xff]
    %v287 = vld [vmem:[#allocation8 + $0x110] sm:$0xff]
    %v288 = vld [vmem:[#allocation8 + $0x118] sm:$0xff]
    %v289 = vld [vmem:[#allocation8 + $0x120] sm:$0xff]
    %v290 = vld [vmem:[#allocation8 + $0x128] sm:$0xff]
    %v291 = vld [vmem:[#allocation8 + $0x130] sm:$0xff]
    %v292 = vld [vmem:[#allocation8 + $0x138] sm:$0xff]
    %v293 = vld [vmem:[#allocation8 + $0x140] sm:$0xff]
    %v294 = vld [vmem:[#allocation8 + $0x148] sm:$0xff]
    %v295 = vld [vmem:[#allocation8 + $0x150] sm:$0xff]
    %v296 = vld [vmem:[#allocation8 + $0x158] sm:$0xff]
    %v297 = vld [vmem:[#allocation8 + $0x160] sm:$0xff]
    %v298 = vld [vmem:[#allocation8 + $0x168] sm:$0xff]
    %v299 = vld [vmem:[#allocation8 + $0x170] sm:$0xff]
    %v300 = vld [vmem:[#allocation8 + $0x178] sm:$0xff]
    %v301 = vld [vmem:[#allocation8 + $0x180] sm:$0xff]
    %v302 = vld [vmem:[#allocation8 + $0x188] sm:$0xff]
    %v303 = vld [vmem:[#allocation8 + $0x190] sm:$0xff]
    %v304 = vld [vmem:[#allocation8 + $0x198] sm:$0xff]
    %v305 = vld [vmem:[#allocation8 + $0x1a0] sm:$0xff]
    %v306 = vld [vmem:[#allocation8 + $0x1a8] sm:$0xff]
    %v307 = vld [vmem:[#allocation8 + $0x1b0] sm:$0xff]
    %v308 = vld [vmem:[#allocation8 + $0x1b8] sm:$0xff]
    %v309 = vld [vmem:[#allocation8 + $0x1c0] sm:$0xff]
    %v310 = vld [vmem:[#allocation8 + $0x1c8] sm:$0xff]
    %v311 = vld [vmem:[#allocation8 + $0x1d0] sm:$0xff]
    %v312 = vld [vmem:[#allocation8 + $0x1d8] sm:$0xff]
    %v313 = vld [vmem:[#allocation8 + $0x1e0] sm:$0xff]
    %v314 = vld [vmem:[#allocation8 + $0x1e8] sm:$0xff]
    %v315 = vld [vmem:[#allocation8 + $0x1f0] sm:$0xff]
    %v316 = vld [vmem:[#allocation8 + $0x1f8] sm:$0xff]
    %v317 = vld [vmem:[#allocation10] sm:$0x3]
    %v319 = vlaneseq
    %v320 = vshrl.u32 %v319, 7
    %v321 = vsub.s32 0, %v320
    %v322 = vrot.slane %v317, %v321
    %v323 = vlaneseq
    %v324 = vshrl.u32 %v323, 7
    %v325 = vsub.s32 1, %v324
    %v326 = vrot.slane %v317, %v325
    %v393 = vunpack.c.l.b16 %v253
    %v394 = vunpack.c.h.b16 %v253
    %v395 = vunpack.c.l.b16 %v254
    %v396 = vunpack.c.h.b16 %v254
    %v397 = vunpack.c.l.b16 %v255
    %v398 = vunpack.c.h.b16 %v255
    %v399 = vunpack.c.l.b16 %v256
    %v400 = vunpack.c.h.b16 %v256
    %v401 = vunpack.c.l.b16 %v257
    %v402 = vunpack.c.h.b16 %v257
    %v403 = vunpack.c.l.b16 %v258
    %v404 = vunpack.c.h.b16 %v258
    %v405 = vunpack.c.l.b16 %v259
    %v406 = vunpack.c.h.b16 %v259
    %v407 = vunpack.c.l.b16 %v260
    %v408 = vunpack.c.h.b16 %v260
    %v409 = vunpack.c.l.b16 %v261
    %v410 = vunpack.c.h.b16 %v261
    %v411 = vunpack.c.l.b16 %v262
    %v412 = vunpack.c.h.b16 %v262
    %v413 = vunpack.c.l.b16 %v263
    %v414 = vunpack.c.h.b16 %v263
    %v415 = vunpack.c.l.b16 %v264
    %v416 = vunpack.c.h.b16 %v264
    %v417 = vunpack.c.l.b16 %v265
    %v418 = vunpack.c.h.b16 %v265
    %v419 = vunpack.c.l.b16 %v266
    %v420 = vunpack.c.h.b16 %v266
    %v421 = vunpack.c.l.b16 %v267
    %v422 = vunpack.c.h.b16 %v267
    %v423 = vunpack.c.l.b16 %v268
    %v424 = vunpack.c.h.b16 %v268
    %v425 = vunpack.c.l.b16 %v269
    %v426 = vunpack.c.h.b16 %v269
    %v427 = vunpack.c.l.b16 %v270
    %v428 = vunpack.c.h.b16 %v270
    %v429 = vunpack.c.l.b16 %v271
    %v430 = vunpack.c.h.b16 %v271
    %v431 = vunpack.c.l.b16 %v272
    %v432 = vunpack.c.h.b16 %v272
    %v433 = vunpack.c.l.b16 %v273
    %v434 = vunpack.c.h.b16 %v273
    %v435 = vunpack.c.l.b16 %v274
    %v436 = vunpack.c.h.b16 %v274
    %v437 = vunpack.c.l.b16 %v275
    %v438 = vunpack.c.h.b16 %v275
    %v439 = vunpack.c.l.b16 %v276
    %v440 = vunpack.c.h.b16 %v276
    %v441 = vunpack.c.l.b16 %v277
    %v442 = vunpack.c.h.b16 %v277
    %v443 = vunpack.c.l.b16 %v278
    %v444 = vunpack.c.h.b16 %v278
    %v445 = vunpack.c.l.b16 %v279
    %v446 = vunpack.c.h.b16 %v279
    %v447 = vunpack.c.l.b16 %v280
    %v448 = vunpack.c.h.b16 %v280
    %v449 = vunpack.c.l.b16 %v281
    %v450 = vunpack.c.h.b16 %v281
    %v451 = vunpack.c.l.b16 %v282
    %v452 = vunpack.c.h.b16 %v282
    %v453 = vunpack.c.l.b16 %v283
    %v454 = vunpack.c.h.b16 %v283
    %v455 = vunpack.c.l.b16 %v284
    %v456 = vunpack.c.h.b16 %v284
    %v457 = vunpack.c.l.b16 %v285
    %v458 = vunpack.c.h.b16 %v285
    %v459 = vunpack.c.l.b16 %v286
    %v460 = vunpack.c.h.b16 %v286
    %v461 = vunpack.c.l.b16 %v287
    %v462 = vunpack.c.h.b16 %v287
    %v463 = vunpack.c.l.b16 %v288
    %v464 = vunpack.c.h.b16 %v288
    %v465 = vunpack.c.l.b16 %v289
    %v466 = vunpack.c.h.b16 %v289
    %v467 = vunpack.c.l.b16 %v290
    %v468 = vunpack.c.h.b16 %v290
    %v469 = vunpack.c.l.b16 %v291
    %v470 = vunpack.c.h.b16 %v291
    %v471 = vunpack.c.l.b16 %v292
    %v472 = vunpack.c.h.b16 %v292
    %v473 = vunpack.c.l.b16 %v293
    %v474 = vunpack.c.h.b16 %v293
    %v475 = vunpack.c.l.b16 %v294
    %v476 = vunpack.c.h.b16 %v294
    %v477 = vunpack.c.l.b16 %v295
    %v478 = vunpack.c.h.b16 %v295
    %v479 = vunpack.c.l.b16 %v296
    %v480 = vunpack.c.h.b16 %v296
    %v481 = vunpack.c.l.b16 %v297
    %v482 = vunpack.c.h.b16 %v297
    %v483 = vunpack.c.l.b16 %v298
    %v484 = vunpack.c.h.b16 %v298
    %v485 = vunpack.c.l.b16 %v299
    %v486 = vunpack.c.h.b16 %v299
    %v487 = vunpack.c.l.b16 %v300
    %v488 = vunpack.c.h.b16 %v300
    %v489 = vunpack.c.l.b16 %v301
    %v490 = vunpack.c.h.b16 %v301
    %v491 = vunpack.c.l.b16 %v302
    %v492 = vunpack.c.h.b16 %v302
    %v493 = vunpack.c.l.b16 %v303
    %v494 = vunpack.c.h.b16 %v303
    %v495 = vunpack.c.l.b16 %v304
    %v496 = vunpack.c.h.b16 %v304
    %v497 = vunpack.c.l.b16 %v305
    %v498 = vunpack.c.h.b16 %v305
    %v499 = vunpack.c.l.b16 %v306
    %v500 = vunpack.c.h.b16 %v306
    %v501 = vunpack.c.l.b16 %v307
    %v502 = vunpack.c.h.b16 %v307
    %v503 = vunpack.c.l.b16 %v308
    %v504 = vunpack.c.h.b16 %v308
    %v505 = vunpack.c.l.b16 %v309
    %v506 = vunpack.c.h.b16 %v309
    %v507 = vunpack.c.l.b16 %v310
    %v508 = vunpack.c.h.b16 %v310
    %v509 = vunpack.c.l.b16 %v311
    %v510 = vunpack.c.h.b16 %v311
    %v511 = vunpack.c.l.b16 %v312
    %v512 = vunpack.c.h.b16 %v312
    %v513 = vunpack.c.l.b16 %v313
    %v514 = vunpack.c.h.b16 %v313
    %v515 = vunpack.c.l.b16 %v314
    %v516 = vunpack.c.h.b16 %v314
    %v517 = vunpack.c.l.b16 %v315
    %v518 = vunpack.c.h.b16 %v315
    %v519 = vunpack.c.l.b16 %v316
    %v520 = vunpack.c.h.b16 %v316
    %v521 = vpack.c.b16 %v395, %v393
    %v522 = vpack.c.b16 %v396, %v394
    %v523 = vpack.c.b16 %v399, %v397
    %v524 = vpack.c.b16 %v400, %v398
    %v525 = vpack.c.b16 %v403, %v401
    %v526 = vpack.c.b16 %v404, %v402
    %v527 = vpack.c.b16 %v407, %v405
    %v528 = vpack.c.b16 %v408, %v406
    %v529 = vpack.c.b16 %v411, %v409
    %v530 = vpack.c.b16 %v412, %v410
    %v531 = vpack.c.b16 %v415, %v413
    %v532 = vpack.c.b16 %v416, %v414
    %v533 = vpack.c.b16 %v419, %v417
    %v534 = vpack.c.b16 %v420, %v418
    %v535 = vpack.c.b16 %v423, %v421
    %v536 = vpack.c.b16 %v424, %v422
    %v537 = vpack.c.b16 %v427, %v425
    %v538 = vpack.c.b16 %v428, %v426
    %v539 = vpack.c.b16 %v431, %v429
    %v540 = vpack.c.b16 %v432, %v430
    %v541 = vpack.c.b16 %v435, %v433
    %v542 = vpack.c.b16 %v436, %v434
    %v543 = vpack.c.b16 %v439, %v437
    %v544 = vpack.c.b16 %v440, %v438
    %v545 = vpack.c.b16 %v443, %v441
    %v546 = vpack.c.b16 %v444, %v442
    %v547 = vpack.c.b16 %v447, %v445
    %v548 = vpack.c.b16 %v448, %v446
    %v549 = vpack.c.b16 %v451, %v449
    %v550 = vpack.c.b16 %v452, %v450
    %v551 = vpack.c.b16 %v455, %v453
    %v552 = vpack.c.b16 %v456, %v454
    %v553 = vpack.c.b16 %v459, %v457
    %v554 = vpack.c.b16 %v460, %v458
    %v555 = vpack.c.b16 %v463, %v461
    %v556 = vpack.c.b16 %v464, %v462
    %v557 = vpack.c.b16 %v467, %v465
    %v558 = vpack.c.b16 %v468, %v466
    %v559 = vpack.c.b16 %v471, %v469
    %v560 = vpack.c.b16 %v472, %v470
    %v561 = vpack.c.b16 %v475, %v473
    %v562 = vpack.c.b16 %v476, %v474
    %v563 = vpack.c.b16 %v479, %v477
    %v564 = vpack.c.b16 %v480, %v478
    %v565 = vpack.c.b16 %v483, %v481
    %v566 = vpack.c.b16 %v484, %v482
    %v567 = vpack.c.b16 %v487, %v485
    %v568 = vpack.c.b16 %v488, %v486
    %v569 = vpack.c.b16 %v491, %v489
    %v570 = vpack.c.b16 %v492, %v490
    %v571 = vpack.c.b16 %v495, %v493
    %v572 = vpack.c.b16 %v496, %v494
    %v573 = vpack.c.b16 %v499, %v497
    %v574 = vpack.c.b16 %v500, %v498
    %v575 = vpack.c.b16 %v503, %v501
    %v576 = vpack.c.b16 %v504, %v502
    %v577 = vpack.c.b16 %v507, %v505
    %v578 = vpack.c.b16 %v508, %v506
    %v579 = vpack.c.b16 %v511, %v509
    %v580 = vpack.c.b16 %v512, %v510
    %v581 = vpack.c.b16 %v515, %v513
    %v582 = vpack.c.b16 %v516, %v514
    %v583 = vpack.c.b16 %v519, %v517
    %v584 = vpack.c.b16 %v520, %v518
    %649 = vmatprep.subr.bf16.mxu0 %v536
    %650 = vmatpush1.bf16.msra.mxu0 %v535
    %651 = vmatprep.subr.bf16.mxu0 %v534
    %652 = vmatpush1.bf16.msra.mxu0 %v533
    %653 = vmatprep.subr.bf16.mxu0 %v532
    %654 = vmatpush1.bf16.msra.mxu0 %v531
    %655 = vmatprep.subr.bf16.mxu0 %v530
    %656 = vmatpush1.bf16.msra.mxu0 %v529
    %657 = vmatprep.subr.bf16.mxu0 %v528
    %658 = vmatpush1.bf16.msra.mxu0 %v527
    %659 = vmatprep.subr.bf16.mxu0 %v526
    %660 = vmatpush1.bf16.msra.mxu0 %v525
    %661 = vmatprep.subr.bf16.mxu0 %v524
    %662 = vmatpush1.bf16.msra.mxu0 %v523
    %663 = vmatprep.subr.bf16.mxu0 %v522
    %664 = vmatpush1.bf16.msra.mxu0 %v521
    %665 = vmatprep.subr.bf16.mxu0 %v552
    %666 = vmatpush2.bf16.msra.mxu0 %v551
    %667 = vmatprep.subr.bf16.mxu0 %v550
    %668 = vmatpush2.bf16.msra.mxu0 %v549
    %669 = vmatprep.subr.bf16.mxu0 %v548
    %670 = vmatpush2.bf16.msra.mxu0 %v547
    %671 = vmatprep.subr.bf16.mxu0 %v546
    %672 = vmatpush2.bf16.msra.mxu0 %v545
    %673 = vmatprep.subr.bf16.mxu0 %v544
    %674 = vmatpush2.bf16.msra.mxu0 %v543
    %675 = vmatprep.subr.bf16.mxu0 %v542
    %676 = vmatpush2.bf16.msra.mxu0 %v541
    %677 = vmatprep.subr.bf16.mxu0 %v540
    %678 = vmatpush2.bf16.msra.mxu0 %v539
    %679 = vmatprep.subr.bf16.mxu0 %v538
    %680 = vmatpush2.bf16.msra.mxu0 %v537
    %681 = vmatprep.mubr.bf16.mxu0 %v250
    %682 = vmatmul.mubr.bf16.gmra.mxu0 %v249
    %v683 = vpop.f32.mrf.mxu0
    %v684 = vadd.f32 %v322, %v683
    %v685 = vpop.f32.mrf.mxu0
    %v686 = vadd.f32 %v326, %v685
    %v687 = vpop.f32.mrf.mxu0
    %v688 = vpop.f32.mrf.mxu0
    %689 = vdwg.mxu0
    %690 = vmatprep.subr.bf16.mxu0 %v568
    %691 = vmatpush1.bf16.msra.mxu0 %v567
    %692 = vmatprep.subr.bf16.mxu0 %v566
    %693 = vmatpush1.bf16.msra.mxu0 %v565
    %694 = vmatprep.subr.bf16.mxu0 %v564
    %695 = vmatpush1.bf16.msra.mxu0 %v563
    %696 = vmatprep.subr.bf16.mxu0 %v562
    %697 = vmatpush1.bf16.msra.mxu0 %v561
    %698 = vmatprep.subr.bf16.mxu0 %v560
    %699 = vmatpush1.bf16.msra.mxu0 %v559
    %700 = vmatprep.subr.bf16.mxu0 %v558
    %701 = vmatpush1.bf16.msra.mxu0 %v557
    %702 = vmatprep.subr.bf16.mxu0 %v556
    %703 = vmatpush1.bf16.msra.mxu0 %v555
    %704 = vmatprep.subr.bf16.mxu0 %v554
    %705 = vmatpush1.bf16.msra.mxu0 %v553
    %706 = vmatprep.subr.bf16.mxu0 %v584
    %707 = vmatpush2.bf16.msra.mxu0 %v583
    %708 = vmatprep.subr.bf16.mxu0 %v582
    %709 = vmatpush2.bf16.msra.mxu0 %v581
    %710 = vmatprep.subr.bf16.mxu0 %v580
    %711 = vmatpush2.bf16.msra.mxu0 %v579
    %712 = vmatprep.subr.bf16.mxu0 %v578
    %713 = vmatpush2.bf16.msra.mxu0 %v577
    %714 = vmatprep.subr.bf16.mxu0 %v576
    %715 = vmatpush2.bf16.msra.mxu0 %v575
    %716 = vmatprep.subr.bf16.mxu0 %v574
    %717 = vmatpush2.bf16.msra.mxu0 %v573
    %718 = vmatprep.subr.bf16.mxu0 %v572
    %719 = vmatpush2.bf16.msra.mxu0 %v571
    %720 = vmatprep.subr.bf16.mxu0 %v570
    %721 = vmatpush2.bf16.msra.mxu0 %v569
    %722 = vmatprep.mubr.bf16.mxu0 %v252
    %723 = vmatmul.mubr.bf16.gmra.mxu0 %v251
    %v724 = vpop.f32.mrf.mxu0
    %v725 = vadd.f32 %v684, %v724
    %v726 = vpop.f32.mrf.mxu0
    %v727 = vadd.f32 %v686, %v726
    %v728 = vpop.f32.mrf.mxu0
    %v729 = vpop.f32.mrf.mxu0
    %730 = vdwg.mxu0
    %v731 = vld [vmem:[%s5] sm:$0xff]
    %v732 = vmul.f32 %v727, 0.5
    %v733 = vmul.f32 %v732, 1.442695
    %v734 = vpow.pop %v733
    %v735 = vmul.f32 %v731, %v734
    %v736 = vadd.f32 %v725, %v735
    %vm737 = vcmask 130048
    %738 = vst.msk [vmem:[#allocation11] sm:$0xff] %vm737, %v736
    %739 = vst.msk [vmem:[#allocation12] sm:$0xff] %vm737, %v725
    %740 = vst.msk [vmem:[#allocation14] sm:$0xff] %vm737, %v727
    // Predicated region
    $region46: #{tpu_custom_call.1} parent=1 // pred_check
      _
    $region47: #{tpu_custom_call.1} parent=1 // pred_check_branch
      %742 = sbr.rel (0) target = $region49
    $region48: #{tpu_custom_call.1} parent=1 // pred_region
      %s744 = ssub.s32 128, 128
      %745 = vsyncadd [#allocation4], %s744
      %s747 = sshll.u32 [#allocation11], 4
      %s748 = int_to_ptr.vmem [resolvable:$true] %s747
      %750 = dma.vmem_to_hbm [thread:$0]  %s748, 128, %s6, [#allocation4]
    $region49: #{tpu_custom_call.1} parent=1 // pred_fallthru
      _
    // Predicated region
    $region50: #{tpu_custom_call.1} parent=1 // pred_check
      _
    $region51: #{tpu_custom_call.1} parent=1 // pred_check_branch
      %752 = sbr.rel (0) target = $region53
    $region52: #{tpu_custom_call.1} parent=1 // pred_region
      %s754 = ssub.s32 128, 128
      %755 = vsyncadd [#allocation13], %s754
      %s757 = sshll.u32 [#allocation12], 4
      %s758 = int_to_ptr.vmem [resolvable:$true] %s757
      %760 = dma.vmem_to_hbm [thread:$0]  %s758, 128, %s7, [#allocation13]
    $region53: #{tpu_custom_call.1} parent=1 // pred_fallthru
      _
    // Predicated region
    $region54: #{tpu_custom_call.1} parent=1 // pred_check
      _
    $region55: #{tpu_custom_call.1} parent=1 // pred_check_branch
      %762 = sbr.rel (0) target = $region57
    $region56: #{tpu_custom_call.1} parent=1 // pred_region
      %s764 = ssub.s32 128, 128
      %765 = vsyncadd [#allocation13], %s764
      %s767 = sshll.u32 [#allocation14], 4
      %s768 = int_to_ptr.vmem [resolvable:$true] %s767
      %770 = dma.vmem_to_hbm [thread:$0]  %s768, 128, %s8, [#allocation13]
    $region57: #{tpu_custom_call.1} parent=1 // pred_fallthru
      _
    // Predicated region
    $region58: #{tpu_custom_call.1} parent=1 // pred_check
      _
    $region59: #{tpu_custom_call.1} parent=1 // pred_check_branch
      %772 = sbr.rel (0) target = $region61
    $region60: #{tpu_custom_call.1} parent=1 // pred_region
      %773 = dma.done [#allocation4], 128
    $region61: #{tpu_custom_call.1} parent=1 // pred_fallthru
      _
    // Predicated region
    $region62: #{tpu_custom_call.1} parent=1 // pred_check
      _
    $region63: #{tpu_custom_call.1} parent=1 // pred_check_branch
      %775 = sbr.rel (0) target = $region65
    $region64: #{tpu_custom_call.1} parent=1 // pred_region
      %776 = dma.done [#allocation13], 128
    $region65: #{tpu_custom_call.1} parent=1 // pred_fallthru
      _
    // Predicated region
    $region66: #{tpu_custom_call.1} parent=1 // pred_check
      _
    $region67: #{tpu_custom_call.1} parent=1 // pred_check_branch
      %778 = sbr.rel (0) target = $region69
    $region68: #{tpu_custom_call.1} parent=1 // pred_region
      %779 = dma.done [#allocation13], 128
    $region69: #{tpu_custom_call.1} parent=1 // pred_fallthru
      _
    %780 = vsyncpa [#allocation3], 1
    %781 = vsyncpa [#allocation6], 1
    %782 = vsyncpa [#allocation9], 1
    %783 = vsyncpa [#allocation4], 1
    %784 = vsyncpa [#allocation13], 1

</llo_original>
